<compile_context>
chip_gen: v7x
topology: tpu7x:2x2x1
jax: 0.10.0
libtpu: 0.0.40
codegen_flags: <defaults>
</compile_context>

<pallas_src>
import math

import numpy as np
import jax
import jax.numpy as jnp
from jax import lax
from jax.experimental import pallas as pl
from jax.experimental.pallas import tpu as pltpu

TEMPERATURE = 1.0
EPS = 1e-8  # matches torch.nn.CosineSimilarity eps


def _round_up(x, m):
    return ((x + m - 1) // m) * m


def _make_kernel(n_total, k_pairs, tile_q, p_count):
    def kernel(xq_ref, xp_ref, pairs_ref, porig_ref, out_ref, acc_ref, sim_ref):
        # xq_ref:    [TQ, Dp]  bf16, q-slab of scaled/normalized embeddings
        # xp_ref:    [TP, Dp]  bf16, gathered rows of set(pairs[0]) (resident)
        # pairs_ref: [Np, K]   int32, per-row excluded indices (resident)
        # porig_ref: [1, TP]   int32, original index of each gathered p row (-1 pad)
        # out_ref:   [1, TP]   f32, per-p-column partial loss (written once)
        # acc_ref:   [Np, TP]  f32 scratch, neg_sim accumulator over q-tiles
        # sim_ref:   [Np, TP]  f32 scratch, sim[n,p] filled incrementally by q sweep
        k = pl.program_id(0)
        n_rows = acc_ref.shape[0]
        tp = acc_ref.shape[1]

        @pl.when(k == 0)
        def _():
            acc_ref[...] = jnp.zeros_like(acc_ref)

        q_start = pl.multiple_of(k * tile_q, tile_q)

        # sim block for this q-slab: s[q, p] = cos(q, p) / T  (1/T folded into x).
        s = lax.dot_general(xq_ref[...], xp_ref[...], (((1,), (1,)), ((), ())),
                            preferred_element_type=jnp.float32)        # [TQ, TP]
        sim_ref[pl.ds(q_start, tile_q), :] = s
        e_t = jnp.exp(s).astype(jnp.bfloat16)                          # [TQ, TP]

        # Rebuild the neg-mask slab in-kernel from `pairs` (no N x N HBM stream):
        #   negm[n, q] = (q < N) and (q not in pairs[n])
        q_idx = lax.broadcasted_iota(jnp.int32, (n_rows, tile_q), 1) + q_start
        keep = q_idx < n_total
        for kk in range(k_pairs):
            keep = jnp.logical_and(keep, q_idx != pairs_ref[:, kk:kk + 1])
        negm = jnp.where(keep, 1.0, 0.0).astype(jnp.bfloat16)          # [Np, TQ]

        # acc[n, p] += sum_{q in tile} negm[n, q] * exp(cos(p, q)/T)
        acc_ref[...] += lax.dot_general(negm, e_t, (((1,), (0,)), ((), ())),
                                        preferred_element_type=jnp.float32)

        @pl.when(k == pl.num_programs(0) - 1)
        def _():
            a = sim_ref[...]                                           # [Np, TP]
            # -log(pos/(pos+neg)) == log(exp(a) + neg) - a   (log-domain form)
            term = jnp.log(jnp.exp(a) + acc_ref[...]) - a              # [Np, TP]

            n_idx = lax.broadcasted_iota(jnp.int32, (n_rows, tp), 0)
            porig = porig_ref[...]                                     # [1, TP]
            valid = porig >= 0                                         # [1, TP]
            is_self = n_idx == porig                                   # p == n
            term = jnp.where(is_self, 0.0, term)

            # per-row weight 1/(|P \ {n}| * N); exactly 0 on padded rows.
            in_p = jnp.sum(jnp.where(jnp.logical_and(is_self, valid), 1.0, 0.0),
                           axis=1, keepdims=True)                      # [Np, 1]
            row_valid = (lax.broadcasted_iota(jnp.int32, (n_rows, 1), 0)
                         < n_total).astype(jnp.float32)                # [Np, 1]
            inv_cnt = row_valid / ((float(p_count) - in_p) * float(n_total))

            col = jnp.sum(inv_cnt * term, axis=0, keepdims=True)       # [1, TP]
            out_ref[...] = col * valid.astype(jnp.float32)

    return kernel


def contrastive_cosine_loss(output_anchor, output_pos, output_neg, pairs,
                            temperature=TEMPERATURE, tile_q=256):
    """JAX/Pallas equivalent of ContrastiveCosineLoss.forward."""
    assert tile_q % 128 == 0

    pairs_np = np.asarray(pairs)
    k_pairs = int(pairs_np.shape[1])

    output = jnp.concatenate(
        [output_anchor, output_pos, output_neg], axis=0).astype(jnp.float32)
    n_total, d = output.shape

    # Host-side set bookkeeping (mirrors the Python set ops in the module).
    p_list = sorted({int(v) for v in pairs_np[0]})
    p_count = len(p_list)
    tp = max(128, _round_up(p_count, 128))

    n_pad = _round_up(n_total, tile_q)
    d_pad = _round_up(d, 128)
    inv_t = 1.0 / float(temperature)

    # Normalize (torch CosineSimilarity eps semantics) and fold 1/T via sqrt scale.
    sumsq = jnp.sum(output * output, axis=-1, keepdims=True)
    xnorm = output * lax.rsqrt(jnp.maximum(sumsq, EPS * EPS))
    xnorm = xnorm * np.float32(math.sqrt(inv_t))

    xp = jnp.pad(xnorm[np.asarray(p_list, dtype=np.int32)],
                 ((0, tp - p_count), (0, d_pad - d))).astype(jnp.bfloat16)
    xq = jnp.pad(xnorm, ((0, n_pad - n_total), (0, d_pad - d))).astype(jnp.bfloat16)

    pairs_pad = jnp.pad(jnp.asarray(pairs_np, dtype=jnp.int32),
                        ((0, n_pad - n_total), (0, 0)))                 # [Np, K]
    p_orig = jnp.asarray(
        np.pad(np.asarray(p_list, dtype=np.int32), (0, tp - p_count),
               constant_values=-1)).reshape(1, tp)                      # [1, TP]

    n_q_tiles = n_pad // tile_q

    # VMEM budget computed from shapes (review #4).  Scratch is single-buffered,
    # BlockSpec inputs double-buffered, narrow int32 arrays lane-pad to 128.
    est = (2 * n_pad * tp * 4                           # acc + sim scratch
           + 2 * tile_q * d_pad * 2                     # xq stream (x2 buffers)
           + 2 * tp * d_pad * 2                         # xp resident (x2 buffers)
           + 2 * n_pad * _round_up(k_pairs, 128) * 4    # pairs (lane-padded)
           + 4 * 8 * tp * 4)                            # p_orig + out
    vmem_limit = int(min(110 * 2**20, max(8 * 2**20, est * 5 // 4 + (2 << 20))))
    # TODO(synk): cap at ~60 MiB when targeting v7x (64 MiB per-TC VMEM).

    partial = pl.pallas_call(
        _make_kernel(n_total, k_pairs, tile_q, p_count),
        out_shape=jax.ShapeDtypeStruct((1, tp), jnp.float32),
        grid_spec=pltpu.PrefetchScalarGridSpec(
            num_scalar_prefetch=0,
            grid=(n_q_tiles,),
            in_specs=[
                pl.BlockSpec((tile_q, d_pad), lambda k: (k, 0)),   # xq q-slab
                pl.BlockSpec((tp, d_pad), lambda k: (0, 0)),       # xp (resident)
                pl.BlockSpec((n_pad, k_pairs), lambda k: (0, 0)),  # pairs (resident)
                pl.BlockSpec((1, tp), lambda k: (0, 0)),           # p_orig
            ],
            out_specs=pl.BlockSpec((1, tp), lambda k: (0, 0)),
            scratch_shapes=[pltpu.VMEM((n_pad, tp), jnp.float32),  # acc (neg_sim)
                            pltpu.VMEM((n_pad, tp), jnp.float32)], # sim
        ),
        compiler_params=pltpu.CompilerParams(
            dimension_semantics=("arbitrary",),
            vmem_limit_bytes=vmem_limit,
        ),
    )(xq, xp, pairs_pad, p_orig)
    # TODO(synk): constant-index residents (xp, pairs) could use Buffered(1) to
    #             halve their VMEM footprint at very large N.

    return jnp.sum(partial)


# ----------------------------- references ---------------------------------

def _reference_loss_loops(anchor, pos, neg, pairs, temperature=TEMPERATURE):
    """Faithful loop-for-loop numpy re-implementation of the PyTorch forward."""
    out = np.concatenate([np.asarray(anchor), np.asarray(pos), np.asarray(neg)],
                         axis=0).astype(np.float64)
    n_total = out.shape[0]
    pairs = np.asarray(pairs)

    def cos(a, b):
        na = max(np.linalg.norm(a), EPS)
        nb = max(np.linalg.norm(b), EPS)
        return float(np.dot(a, b) / (na * nb))

    losses = []
    for n in range(n_total):
        pair_pos = set(pairs[0].tolist()) - {n}
        pair_neg = set(range(n_total)) - set(pairs[n].tolist())
        terms = []
        for p in pair_pos:
            neg_sim = sum(np.exp(cos(out[p], out[q]) / temperature) for q in pair_neg)
            pos_sim = np.exp(cos(out[n], out[p]) / temperature)
            terms.append(-np.log(pos_sim / (pos_sim + neg_sim)))
        losses.append(np.mean(terms))
    return float(np.mean(losses))


def _reference_loss_vec(anchor, pos, neg, pairs, temperature=TEMPERATURE):
    """Vectorized float64 numpy reference (same set semantics)."""
    out = np.concatenate([np.asarray(anchor), np.asarray(pos), np.asarray(neg)],
                         axis=0).astype(np.float64)
    n_total = out.shape[0]
    pairs = np.asarray(pairs)
    norms = np.maximum(np.linalg.norm(out, axis=1), EPS)
    xh = out / norms[:, None]
    E = np.exp((xh @ xh.T) / temperature)
    in_pairs = (pairs[:, :, None] == np.arange(n_total)[None, None, :]).any(axis=1)
    negm = ~in_pairs
    pos_set = in_pairs[0]
    losses = []
    for n in range(n_total):
        ppos = [p for p in range(n_total) if pos_set[p] and p != n]
        terms = []
        for p in ppos:
            neg_sim = E[p, negm[n]].sum()
            terms.append(-np.log(E[n, p] / (E[n, p] + neg_sim)))
        losses.append(np.mean(terms))
    return float(np.mean(losses))


def _make_pairs(batch):
    """pairs[i]: anchor i <-> pos i; negatives pair with themselves."""
    n = 3 * batch
    pairs = np.zeros((n, 2), dtype=np.int32)
    for i in range(batch):
        pairs[i] = [i, i + batch]
        pairs[i + batch] = [i + batch, i]
    for i in range(2 * batch, n):
        pairs[i] = [i, i]
    return pairs


if __name__ == "__main__":
    key = jax.random.PRNGKey(0)

    # --- small case (matches the module's tiny shapes): grid (1,) -------------
    k1, k2, k3, k4, k5, k6 = jax.random.split(key, 6)
    batch, hidden = 2, 32  # N = 3 * batch = 6
    a_s = jax.random.normal(k1, (batch, hidden), dtype=jnp.float32)
    p_s = jax.random.normal(k2, (batch, hidden), dtype=jnp.float32)
    n_s = jax.random.normal(k3, (batch, hidden), dtype=jnp.float32)
    pairs_s = _make_pairs(batch)

    loss_s = jax.block_until_ready(contrastive_cosine_loss(a_s, p_s, n_s, pairs_s))
    ref_s_loop = _reference_loss_loops(a_s, p_s, n_s, pairs_s)
    ref_s_vec = _reference_loss_vec(a_s, p_s, n_s, pairs_s)
    assert np.allclose(ref_s_loop, ref_s_vec, rtol=1e-10, atol=1e-10)
    assert np.allclose(float(loss_s), ref_s_loop, rtol=3e-2, atol=1e-3), \
        (float(loss_s), ref_s_loop)

    # --- medium case: exercises a multi-step q grid (2,) and padding ----------
    batch_m, hidden_m = 86, 32  # N = 258 -> padded 512 -> grid (2,)
    a_m = jax.random.normal(k4, (batch_m, hidden_m), dtype=jnp.float32)
    p_m = jax.random.normal(k5, (batch_m, hidden_m), dtype=jnp.float32)
    n_m = jax.random.normal(k6, (batch_m, hidden_m), dtype=jnp.float32)
    pairs_m = _make_pairs(batch_m)

    loss_m = jax.block_until_ready(contrastive_cosine_loss(a_m, p_m, n_m, pairs_m))
    ref_m = _reference_loss_vec(a_m, p_m, n_m, pairs_m)
    assert np.allclose(float(loss_m), ref_m, rtol=3e-2, atol=1e-3), \
        (float(loss_m), ref_m)

    print("KERNEL_OK")
</pallas_src>

<mosaic_0001>
module attributes {stable_mosaic.version = 11 : i64} {
  func.func @kernel(%arg0: i32, %arg1: memref<256x128xbf16, #tpu.memory_space<vmem>>, %arg2: memref<128x128xbf16, #tpu.memory_space<vmem>>, %arg3: memref<256x2xi32, #tpu.memory_space<vmem>>, %arg4: memref<1x128xi32, #tpu.memory_space<vmem>>, %arg5: memref<1x128xf32, #tpu.memory_space<vmem>>, %arg6: memref<256x128xf32, #tpu.memory_space<vmem>>, %arg7: memref<256x128xf32, #tpu.memory_space<vmem>>) attributes {dimension_semantics = [#tpu.dimension_semantics<arbitrary>], iteration_bounds = array<i64: 1>, scalar_prefetch = 0 : i64, scratch_operands = 2 : i64, tpu.core_type = #tpu.core_type<tc>, window_params = [{transform_indices = @transform_0, window_bounds = array<i64: 256, 128>}, {pipeline_mode = #tpu.pipeline_mode<synchronous>, transform_indices = @transform_1, window_bounds = array<i64: 128, 128>}, {pipeline_mode = #tpu.pipeline_mode<synchronous>, transform_indices = @transform_2, window_bounds = array<i64: 256, 2>}, {pipeline_mode = #tpu.pipeline_mode<synchronous>, transform_indices = @transform_3, window_bounds = array<i64: 1, 128>}, {pipeline_mode = #tpu.pipeline_mode<synchronous>, transform_indices = @transform_4, window_bounds = array<i64: 1, 128>}]} {
    %c0_i32 = arith.constant 0 : i32
    %0 = arith.cmpi eq, %arg0, %c0_i32 : i32
    %1 = arith.extui %0 : i1 to i32
    %c0_i32_0 = arith.constant 0 : i32
    %2 = arith.cmpi ne, %1, %c0_i32_0 : i32
    scf.if %2 {
      %cst_17 = arith.constant 0.000000e+00 : f32
      %36 = vector.broadcast %cst_17 : f32 to vector<256x128xf32>
      %c0_18 = arith.constant 0 : index
      %c0_19 = arith.constant 0 : index
      %37 = vector.load %arg6[%c0_18, %c0_19] : memref<256x128xf32, #tpu.memory_space<vmem>>, vector<256x128xf32>
      tpu.vector_store %arg6[%c0_18, %c0_19], %36 {strides = array<i32>} : memref<256x128xf32, #tpu.memory_space<vmem>>, vector<256x128xf32>,
    } else {
    }
    %c256_i32 = arith.constant 256 : i32
    %3 = arith.muli %arg0, %c256_i32 : i32
    %4 = tpu.assume_multiple %3, 256 : i32
    %c0 = arith.constant 0 : index
    %c0_1 = arith.constant 0 : index
    %5 = vector.load %arg1[%c0, %c0_1] : memref<256x128xbf16, #tpu.memory_space<vmem>>, vector<256x128xbf16>
    %c0_2 = arith.constant 0 : index
    %c0_3 = arith.constant 0 : index
    %6 = vector.load %arg2[%c0_2, %c0_3] : memref<128x128xbf16, #tpu.memory_space<vmem>>, vector<128x128xbf16>
    %cst = arith.constant dense<0.000000e+00> : vector<256x128xf32>
    %7 = tpu.matmul %5, %6, %cst {dimension_numbers = #tpu.dot_dimension_numbers<[1], [1], [0], [0], [0, 0, 1, 0], [], []>} : vector<256x128xbf16>, vector<128x128xbf16>, vector<256x128xf32> -> vector<256x128xf32>
    %8 = arith.index_cast %4 : i32 to index
    %c0_4 = arith.constant 0 : index
    %9 = vector.load %arg7[%8, %c0_4] : memref<256x128xf32, #tpu.memory_space<vmem>>, vector<256x128xf32>
    tpu.vector_store %arg7[%8, %c0_4], %7 {strides = array<i32>} : memref<256x128xf32, #tpu.memory_space<vmem>>, vector<256x128xf32>,
    %10 = math.exp %7 : vector<256x128xf32>
    %11 = arith.truncf %10 : vector<256x128xf32> to vector<256x128xbf16>
    %12 = tpu.iota {dimensions = array<i32: 1>} : vector<256x256xi32>
    %13 = vector.broadcast %4 : i32 to vector<256x256xi32>
    %14 = arith.addi %12, %13 : vector<256x256xi32>
    %c6_i32 = arith.constant 6 : i32
    %15 = vector.broadcast %c6_i32 : i32 to vector<256x256xi32>
    %16 = arith.cmpi slt, %14, %15 : vector<256x256xi32>
    %c0_5 = arith.constant 0 : index
    %c0_6 = arith.constant 0 : index
    %17 = vector.load %arg3[%c0_5, %c0_6] : memref<256x2xi32, #tpu.memory_space<vmem>>, vector<256x1xi32>
    %18 = vector.broadcast %17 : vector<256x1xi32> to vector<256x256xi32>
    %19 = arith.cmpi ne, %14, %18 : vector<256x256xi32>
    %20 = arith.andi %16, %19 : vector<256x256xi1>
    %c0_7 = arith.constant 0 : index
    %c1 = arith.constant 1 : index
    %21 = vector.load %arg3[%c0_7, %c1] : memref<256x2xi32, #tpu.memory_space<vmem>>, vector<256x1xi32>
    %22 = vector.broadcast %21 : vector<256x1xi32> to vector<256x256xi32>
    %23 = arith.cmpi ne, %14, %22 : vector<256x256xi32>
    %24 = arith.andi %20, %23 : vector<256x256xi1>
    %cst_8 = arith.constant 1.000000e+00 : f32
    %cst_9 = arith.constant 0.000000e+00 : f32
    %25 = vector.broadcast %cst_8 : f32 to vector<256x256xf32>
    %26 = vector.broadcast %cst_9 : f32 to vector<256x256xf32>
    %27 = arith.select %24, %25, %26 : vector<256x256xi1>, vector<256x256xf32>
    %28 = arith.truncf %27 : vector<256x256xf32> to vector<256x256xbf16>
    %c0_10 = arith.constant 0 : index
    %c0_11 = arith.constant 0 : index
    %29 = vector.load %arg6[%c0_10, %c0_11] : memref<256x128xf32, #tpu.memory_space<vmem>>, vector<256x128xf32>
    %cst_12 = arith.constant dense<0.000000e+00> : vector<256x128xf32>
    %30 = tpu.matmul %28, %11, %cst_12 {dimension_numbers = #tpu.dot_dimension_numbers<[1], [0], [0], [1], [0, 0, 1, 1], [], []>} : vector<256x256xbf16>, vector<256x128xbf16>, vector<256x128xf32> -> vector<256x128xf32>
    %31 = arith.addf %29, %30 : vector<256x128xf32>
    %c0_13 = arith.constant 0 : index
    %c0_14 = arith.constant 0 : index
    %32 = vector.load %arg6[%c0_13, %c0_14] : memref<256x128xf32, #tpu.memory_space<vmem>>, vector<256x128xf32>
    tpu.vector_store %arg6[%c0_13, %c0_14], %31 {strides = array<i32>} : memref<256x128xf32, #tpu.memory_space<vmem>>, vector<256x128xf32>,
    %c0_i32_15 = arith.constant 0 : i32
    %33 = arith.cmpi eq, %arg0, %c0_i32_15 : i32
    %34 = arith.extui %33 : i1 to i32
    %c0_i32_16 = arith.constant 0 : i32
    %35 = arith.cmpi ne, %34, %c0_i32_16 : i32
    scf.if %35 {
      %c0_17 = arith.constant 0 : index
      %c0_18 = arith.constant 0 : index
      %36 = vector.load %arg7[%c0_17, %c0_18] : memref<256x128xf32, #tpu.memory_space<vmem>>, vector<256x128xf32>
      %37 = math.exp %36 : vector<256x128xf32>
      %c0_19 = arith.constant 0 : index
      %c0_20 = arith.constant 0 : index
      %38 = vector.load %arg6[%c0_19, %c0_20] : memref<256x128xf32, #tpu.memory_space<vmem>>, vector<256x128xf32>
      %39 = arith.addf %37, %38 : vector<256x128xf32>
      %40 = math.log %39 : vector<256x128xf32>
      %41 = arith.subf %40, %36 : vector<256x128xf32>
      %42 = tpu.iota {dimensions = array<i32: 0>} : vector<256x128xi32>
      %c0_21 = arith.constant 0 : index
      %c0_22 = arith.constant 0 : index
      %43 = vector.load %arg4[%c0_21, %c0_22] : memref<1x128xi32, #tpu.memory_space<vmem>>, vector<1x128xi32>
      %c0_i32_23 = arith.constant 0 : i32
      %44 = vector.broadcast %c0_i32_23 : i32 to vector<1x128xi32>
      %45 = arith.cmpi sge, %43, %44 : vector<1x128xi32>
      %46 = vector.broadcast %43 : vector<1x128xi32> to vector<256x128xi32>
      %47 = arith.cmpi eq, %42, %46 : vector<256x128xi32>
      %cst_24 = arith.constant 0.000000e+00 : f32
      %48 = vector.broadcast %cst_24 : f32 to vector<256x128xf32>
      %49 = arith.select %47, %48, %41 : vector<256x128xi1>, vector<256x128xf32>
      %50 = vector.broadcast %45 : vector<1x128xi1> to vector<256x128xi1>
      %51 = arith.andi %47, %50 : vector<256x128xi1>
      %cst_25 = arith.constant 1.000000e+00 : f32
      %cst_26 = arith.constant 0.000000e+00 : f32
      %52 = vector.broadcast %cst_25 : f32 to vector<256x128xf32>
      %53 = vector.broadcast %cst_26 : f32 to vector<256x128xf32>
      %54 = arith.select %51, %52, %53 : vector<256x128xi1>, vector<256x128xf32>
      %cst_27 = arith.constant dense<0.000000e+00> : vector<256xf32>
      %55 = vector.multi_reduction <add>, %54, %cst_27 [1] : vector<256x128xf32> to vector<256xf32>
      %56 = vector.shape_cast %55 : vector<256xf32> to vector<256x1xf32>
      %57 = tpu.iota {dimensions = array<i32: 0>} : vector<256x1xi32>
      %c6_i32_28 = arith.constant 6 : i32
      %58 = vector.broadcast %c6_i32_28 : i32 to vector<256x1xi32>
      %59 = arith.cmpi slt, %57, %58 : vector<256x1xi32>
      %60 = arith.extui %59 : vector<256x1xi1> to vector<256x1xi32>
      %61 = arith.sitofp %60 : vector<256x1xi32> to vector<256x1xf32>
      %cst_29 = arith.constant 2.000000e+00 : f32
      %62 = vector.broadcast %cst_29 : f32 to vector<256x1xf32>
      %63 = arith.subf %62, %56 : vector<256x1xf32>
      %cst_30 = arith.constant 6.000000e+00 : f32
      %64 = vector.broadcast %cst_30 : f32 to vector<256x1xf32>
      %65 = arith.mulf %63, %64 : vector<256x1xf32>
      %66 = arith.divf %61, %65 : vector<256x1xf32>
      %67 = vector.broadcast %66 : vector<256x1xf32> to vector<256x128xf32>
      %68 = arith.mulf %67, %49 : vector<256x128xf32>
      %cst_31 = arith.constant dense<0.000000e+00> : vector<128xf32>
      %69 = vector.multi_reduction <add>, %68, %cst_31 [0] : vector<256x128xf32> to vector<128xf32>
      %70 = vector.shape_cast %69 : vector<128xf32> to vector<1x128xf32>
      %71 = arith.extui %45 : vector<1x128xi1> to vector<1x128xi32>
      %72 = arith.sitofp %71 : vector<1x128xi32> to vector<1x128xf32>
      %73 = arith.mulf %70, %72 : vector<1x128xf32>
      %c0_32 = arith.constant 0 : index
      %c0_33 = arith.constant 0 : index
      %74 = vector.load %arg5[%c0_32, %c0_33] : memref<1x128xf32, #tpu.memory_space<vmem>>, vector<1x128xf32>
      tpu.vector_store %arg5[%c0_32, %c0_33], %73 {strides = array<i32>} : memref<1x128xf32, #tpu.memory_space<vmem>>, vector<1x128xf32>,
    } else {
    }
    return
  }
  func.func @transform_0(%arg0: i32) -> (i32, i32) {
    %c0_i32 = arith.constant 0 : i32
    %c0_i32_0 = arith.constant 0 : i32
    return %arg0, %c0_i32 : i32, i32
  }
  func.func @transform_1(%arg0: i32) -> (i32, i32) {
    %c0_i32 = arith.constant 0 : i32
    %c0_i32_0 = arith.constant 0 : i32
    %c0_i32_1 = arith.constant 0 : i32
    return %c0_i32, %c0_i32_0 : i32, i32
  }
  func.func @transform_2(%arg0: i32) -> (i32, i32) {
    %c0_i32 = arith.constant 0 : i32
    %c0_i32_0 = arith.constant 0 : i32
    %c0_i32_1 = arith.constant 0 : i32
    return %c0_i32, %c0_i32_0 : i32, i32
  }
  func.func @transform_3(%arg0: i32) -> (i32, i32) {
    %c0_i32 = arith.constant 0 : i32
    %c0_i32_0 = arith.constant 0 : i32
    %c0_i32_1 = arith.constant 0 : i32
    return %c0_i32, %c0_i32_0 : i32, i32
  }
  func.func @transform_4(%arg0: i32) -> (i32, i32) {
    %c0_i32 = arith.constant 0 : i32
    %c0_i32_0 = arith.constant 0 : i32
    %c0_i32_1 = arith.constant 0 : i32
    return %c0_i32, %c0_i32_0 : i32, i32
  }
}

</mosaic_0001>

<llo_original>
// kernel: tpu_custom_call.1
$region0: #{tpu_custom_call.1}
  #allocation0 [shape = 'u32[]', space=smem, size = 0x4, offset = 0x4, fixed_abs, tag = 'smem constant byte address 0x4 - core index']
  #allocation1 [shape = 'u32[144,128]{1,0:T(1,128)}', space=vmem, size = 0x12000, scoped, tag = 'internal scratch']
  #allocation2 [shape = 'f32[256,128]{1,0:T(8,128)}', space=vmem, size = 0x20000, scoped, tag = 'scratch operand']
  #allocation3 [shape = 'f32[256,128]{1,0:T(8,128)}', space=vmem, size = 0x20000, scoped, tag = 'scratch operand']
  %s0 = inlined_call_operand.vmem [shape: bf16[256,128], index: 0, kind: input, shape index: {}]
  %s1 = inlined_call_operand.vmem [shape: bf16[128,128], index: 1, kind: input, shape index: {}]
  %s2 = inlined_call_operand.vmem [shape: s32[256,2], index: 2, kind: input, shape index: {}]
  %s3 = inlined_call_operand.vmem [shape: s32[1,128], index: 3, kind: input, shape index: {}]
  %s4 = inlined_call_operand.hbm [shape: f32[1,128], index: 4, kind: output, shape index: {}]
  %s5 = sld [smem:[#allocation0]]
  $region34: #{tpu_custom_call.1} parent=0
    _
  %s7 = ssub.s32 1, %s5
  %s8 = scalar_select 0, %s7, %s5
  $region1: #{tpu_custom_call.1} parent=0
    #allocation4 [shape = 'u8[512]{0}', space=vmem, size = 0x400, scoped, tag = 'output window, operand 0, single buffered']
    #allocation5 [shape = 's32[1]{0}', space=sflag, size = 0x4, scoped, tag = 'scoped memory for tpu_custom_call.1']
    %9 = vsyncpa [#allocation5], 0
    // Predicated region
    $region2: #{tpu_custom_call.1} parent=1 // pred_check
      _
    $region3: #{tpu_custom_call.1} parent=1 // pred_check_branch
      %11 = sbr.rel (0) target = $region5
    $region4: #{tpu_custom_call.1} parent=1 // pred_region
      _
    $region5: #{tpu_custom_call.1} parent=1 // pred_fallthru
      _
    // Predicated region
    $region6: #{tpu_custom_call.1} parent=1 // pred_check
      _
    $region7: #{tpu_custom_call.1} parent=1 // pred_check_branch
      %13 = sbr.rel (0) target = $region9
    $region8: #{tpu_custom_call.1} parent=1 // pred_region
      _
    $region9: #{tpu_custom_call.1} parent=1 // pred_fallthru
      _
    // Predicated region
    $region10: #{tpu_custom_call.1} parent=1 // pred_check
      _
    $region11: #{tpu_custom_call.1} parent=1 // pred_check_branch
      %15 = sbr.rel (0) target = $region13
    $region12: #{tpu_custom_call.1} parent=1 // pred_region
      _
    $region13: #{tpu_custom_call.1} parent=1 // pred_fallthru
      _
    // Predicated region
    $region14: #{tpu_custom_call.1} parent=1 // pred_check
      _
    $region15: #{tpu_custom_call.1} parent=1 // pred_check_branch
      %17 = sbr.rel (0) target = $region17
    $region16: #{tpu_custom_call.1} parent=1 // pred_region
      _
    $region17: #{tpu_custom_call.1} parent=1 // pred_fallthru
      _
    %p19 = scmp.eq.s32.totalorder 0, 0
    // Predicated region
    $region18: #{tpu_custom_call.1} parent=1 // pred_check
      %p20 = pneg %p19
    $region19: #{tpu_custom_call.1} parent=1 // pred_check_branch
      %22 = sbr.rel (%p20) target = $region21
    $region20: #{tpu_custom_call.1} parent=1 // pred_region
      %23 = vst [vmem:[#allocation2] sm:$0xff] 0.0
      %24 = vst [vmem:[#allocation2 + $0x8] sm:$0xff] 0.0
      %25 = vst [vmem:[#allocation2 + $0x10] sm:$0xff] 0.0
      %26 = vst [vmem:[#allocation2 + $0x18] sm:$0xff] 0.0
      %27 = vst [vmem:[#allocation2 + $0x20] sm:$0xff] 0.0
      %28 = vst [vmem:[#allocation2 + $0x28] sm:$0xff] 0.0
      %29 = vst [vmem:[#allocation2 + $0x30] sm:$0xff] 0.0
      %30 = vst [vmem:[#allocation2 + $0x38] sm:$0xff] 0.0
      %31 = vst [vmem:[#allocation2 + $0x40] sm:$0xff] 0.0
      %32 = vst [vmem:[#allocation2 + $0x48] sm:$0xff] 0.0
      %33 = vst [vmem:[#allocation2 + $0x50] sm:$0xff] 0.0
      %34 = vst [vmem:[#allocation2 + $0x58] sm:$0xff] 0.0
      %35 = vst [vmem:[#allocation2 + $0x60] sm:$0xff] 0.0
      %36 = vst [vmem:[#allocation2 + $0x68] sm:$0xff] 0.0
      %37 = vst [vmem:[#allocation2 + $0x70] sm:$0xff] 0.0
      %38 = vst [vmem:[#allocation2 + $0x78] sm:$0xff] 0.0
      %39 = vst [vmem:[#allocation2 + $0x80] sm:$0xff] 0.0
      %40 = vst [vmem:[#allocation2 + $0x88] sm:$0xff] 0.0
      %41 = vst [vmem:[#allocation2 + $0x90] sm:$0xff] 0.0
      %42 = vst [vmem:[#allocation2 + $0x98] sm:$0xff] 0.0
      %43 = vst [vmem:[#allocation2 + $0xa0] sm:$0xff] 0.0
      %44 = vst [vmem:[#allocation2 + $0xa8] sm:$0xff] 0.0
      %45 = vst [vmem:[#allocation2 + $0xb0] sm:$0xff] 0.0
      %46 = vst [vmem:[#allocation2 + $0xb8] sm:$0xff] 0.0
      %47 = vst [vmem:[#allocation2 + $0xc0] sm:$0xff] 0.0
      %48 = vst [vmem:[#allocation2 + $0xc8] sm:$0xff] 0.0
      %49 = vst [vmem:[#allocation2 + $0xd0] sm:$0xff] 0.0
      %50 = vst [vmem:[#allocation2 + $0xd8] sm:$0xff] 0.0
      %51 = vst [vmem:[#allocation2 + $0xe0] sm:$0xff] 0.0
      %52 = vst [vmem:[#allocation2 + $0xe8] sm:$0xff] 0.0
      %53 = vst [vmem:[#allocation2 + $0xf0] sm:$0xff] 0.0
      %54 = vst [vmem:[#allocation2 + $0xf8] sm:$0xff] 0.0
    $region21: #{tpu_custom_call.1} parent=1 // pred_fallthru
      _
    %s55 = smul.u32 0, 256
    %v56 = vld [vmem:[%s0] sm:$0xf]
    %v57 = vld [vmem:[%s0 + $0x4] sm:$0xf]
    %v58 = vld [vmem:[%s0 + $0x8] sm:$0xf]
    %v59 = vld [vmem:[%s0 + $0xc] sm:$0xf]
    %v60 = vld [vmem:[%s0 + $0x10] sm:$0xf]
    %v61 = vld [vmem:[%s0 + $0x14] sm:$0xf]
    %v62 = vld [vmem:[%s0 + $0x18] sm:$0xf]
    %v63 = vld [vmem:[%s0 + $0x1c] sm:$0xf]
    %v64 = vld [vmem:[%s0 + $0x20] sm:$0xf]
    %v65 = vld [vmem:[%s0 + $0x24] sm:$0xf]
    %v66 = vld [vmem:[%s0 + $0x28] sm:$0xf]
    %v67 = vld [vmem:[%s0 + $0x2c] sm:$0xf]
    %v68 = vld [vmem:[%s0 + $0x30] sm:$0xf]
    %v69 = vld [vmem:[%s0 + $0x34] sm:$0xf]
    %v70 = vld [vmem:[%s0 + $0x38] sm:$0xf]
    %v71 = vld [vmem:[%s0 + $0x3c] sm:$0xf]
    %v72 = vld [vmem:[%s0 + $0x40] sm:$0xf]
    %v73 = vld [vmem:[%s0 + $0x44] sm:$0xf]
    %v74 = vld [vmem:[%s0 + $0x48] sm:$0xf]
    %v75 = vld [vmem:[%s0 + $0x4c] sm:$0xf]
    %v76 = vld [vmem:[%s0 + $0x50] sm:$0xf]
    %v77 = vld [vmem:[%s0 + $0x54] sm:$0xf]
    %v78 = vld [vmem:[%s0 + $0x58] sm:$0xf]
    %v79 = vld [vmem:[%s0 + $0x5c] sm:$0xf]
    %v80 = vld [vmem:[%s0 + $0x60] sm:$0xf]
    %v81 = vld [vmem:[%s0 + $0x64] sm:$0xf]
    %v82 = vld [vmem:[%s0 + $0x68] sm:$0xf]
    %v83 = vld [vmem:[%s0 + $0x6c] sm:$0xf]
    %v84 = vld [vmem:[%s0 + $0x70] sm:$0xf]
    %v85 = vld [vmem:[%s0 + $0x74] sm:$0xf]
    %v86 = vld [vmem:[%s0 + $0x78] sm:$0xf]
    %v87 = vld [vmem:[%s0 + $0x7c] sm:$0xf]
    %v88 = vld [vmem:[%s1] sm:$0xf]
    %v89 = vld [vmem:[%s1 + $0x4] sm:$0xf]
    %v90 = vld [vmem:[%s1 + $0x8] sm:$0xf]
    %v91 = vld [vmem:[%s1 + $0xc] sm:$0xf]
    %v92 = vld [vmem:[%s1 + $0x10] sm:$0xf]
    %v93 = vld [vmem:[%s1 + $0x14] sm:$0xf]
    %v94 = vld [vmem:[%s1 + $0x18] sm:$0xf]
    %v95 = vld [vmem:[%s1 + $0x1c] sm:$0xf]
    %v96 = vld [vmem:[%s1 + $0x20] sm:$0xf]
    %v97 = vld [vmem:[%s1 + $0x24] sm:$0xf]
    %v98 = vld [vmem:[%s1 + $0x28] sm:$0xf]
    %v99 = vld [vmem:[%s1 + $0x2c] sm:$0xf]
    %v100 = vld [vmem:[%s1 + $0x30] sm:$0xf]
    %v101 = vld [vmem:[%s1 + $0x34] sm:$0xf]
    %v102 = vld [vmem:[%s1 + $0x38] sm:$0xf]
    %v103 = vld [vmem:[%s1 + $0x3c] sm:$0xf]
    %v136 = vunpack.c.l.b16 %v56
    %v137 = vunpack.c.l.b16 %v57
    %v138 = vunpack.c.l.b16 %v58
    %v139 = vunpack.c.l.b16 %v59
    %v140 = vunpack.c.l.b16 %v60
    %v141 = vunpack.c.l.b16 %v61
    %v142 = vunpack.c.l.b16 %v62
    %v143 = vunpack.c.l.b16 %v63
    %v144 = vunpack.c.l.b16 %v64
    %v145 = vunpack.c.l.b16 %v65
    %v146 = vunpack.c.l.b16 %v66
    %v147 = vunpack.c.l.b16 %v67
    %v148 = vunpack.c.l.b16 %v68
    %v149 = vunpack.c.l.b16 %v69
    %v150 = vunpack.c.l.b16 %v70
    %v151 = vunpack.c.l.b16 %v71
    %v152 = vunpack.c.l.b16 %v72
    %v153 = vunpack.c.l.b16 %v73
    %v154 = vunpack.c.l.b16 %v74
    %v155 = vunpack.c.l.b16 %v75
    %v156 = vunpack.c.l.b16 %v76
    %v157 = vunpack.c.l.b16 %v77
    %v158 = vunpack.c.l.b16 %v78
    %v159 = vunpack.c.l.b16 %v79
    %v160 = vunpack.c.l.b16 %v80
    %v161 = vunpack.c.l.b16 %v81
    %v162 = vunpack.c.l.b16 %v82
    %v163 = vunpack.c.l.b16 %v83
    %v164 = vunpack.c.l.b16 %v84
    %v165 = vunpack.c.l.b16 %v85
    %v166 = vunpack.c.l.b16 %v86
    %v167 = vunpack.c.l.b16 %v87
    %v168 = vpack.c.b16 %v137, %v136
    %v169 = vpack.c.b16 %v139, %v138
    %v170 = vpack.c.b16 %v141, %v140
    %v171 = vpack.c.b16 %v143, %v142
    %v172 = vpack.c.b16 %v145, %v144
    %v173 = vpack.c.b16 %v147, %v146
    %v174 = vpack.c.b16 %v149, %v148
    %v175 = vpack.c.b16 %v151, %v150
    %v176 = vpack.c.b16 %v153, %v152
    %v177 = vpack.c.b16 %v155, %v154
    %v178 = vpack.c.b16 %v157, %v156
    %v179 = vpack.c.b16 %v159, %v158
    %v180 = vpack.c.b16 %v161, %v160
    %v181 = vpack.c.b16 %v163, %v162
    %v182 = vpack.c.b16 %v165, %v164
    %v183 = vpack.c.b16 %v167, %v166
    %v216 = vunpack.c.l.b16 %v88
    %v217 = vunpack.c.l.b16 %v89
    %v218 = vunpack.c.l.b16 %v90
    %v219 = vunpack.c.l.b16 %v91
    %v220 = vunpack.c.l.b16 %v92
    %v221 = vunpack.c.l.b16 %v93
    %v222 = vunpack.c.l.b16 %v94
    %v223 = vunpack.c.l.b16 %v95
    %v224 = vunpack.c.l.b16 %v96
    %v225 = vunpack.c.l.b16 %v97
    %v226 = vunpack.c.l.b16 %v98
    %v227 = vunpack.c.l.b16 %v99
    %v228 = vunpack.c.l.b16 %v100
    %v229 = vunpack.c.l.b16 %v101
    %v230 = vunpack.c.l.b16 %v102
    %v231 = vunpack.c.l.b16 %v103
    %v232 = vpack.c.b16 %v217, %v216
    %v233 = vpack.c.b16 %v219, %v218
    %v234 = vpack.c.b16 %v221, %v220
    %v235 = vpack.c.b16 %v223, %v222
    %v236 = vpack.c.b16 %v225, %v224
    %v237 = vpack.c.b16 %v227, %v226
    %v238 = vpack.c.b16 %v229, %v228
    %v239 = vpack.c.b16 %v231, %v230
    %248 = vmatprep.subr.bf16.mxu0 0
    %249 = vmatpush1.bf16.xpose.msra.mxu0 %v232
    %250 = vmatprep.subr.bf16.mxu0 0
    %251 = vmatpush1.bf16.xpose.msra.mxu0 %v233
    %252 = vmatprep.subr.bf16.mxu0 0
    %253 = vmatpush1.bf16.xpose.msra.mxu0 %v234
    %254 = vmatprep.subr.bf16.mxu0 0
    %255 = vmatpush1.bf16.xpose.msra.mxu0 %v235
    %256 = vmatprep.subr.bf16.mxu0 0
    %257 = vmatpush1.bf16.xpose.msra.mxu0 %v236
    %258 = vmatprep.subr.bf16.mxu0 0
    %259 = vmatpush1.bf16.xpose.msra.mxu0 %v237
    %260 = vmatprep.subr.bf16.mxu0 0
    %261 = vmatpush1.bf16.xpose.msra.mxu0 %v238
    %262 = vmatprep.subr.bf16.mxu0 0
    %263 = vmatpush1.bf16.xpose.msra.mxu0 %v239
    %264 = vmatprep.subr.bf16.mxu0 0
    %265 = vmatpush1.bf16.xpose.msra.mxu0 0
    %266 = vmatprep.subr.bf16.mxu0 0
    %267 = vmatpush1.bf16.xpose.msra.mxu0 0
    %268 = vmatprep.subr.bf16.mxu0 0
    %269 = vmatpush1.bf16.xpose.msra.mxu0 0
    %270 = vmatprep.subr.bf16.mxu0 0
    %271 = vmatpush1.bf16.xpose.msra.mxu0 0
    %272 = vmatprep.subr.bf16.mxu0 0
    %273 = vmatpush1.bf16.xpose.msra.mxu0 0
    %274 = vmatprep.subr.bf16.mxu0 0
    %275 = vmatpush1.bf16.xpose.msra.mxu0 0
    %276 = vmatprep.subr.bf16.mxu0 0
    %277 = vmatpush1.bf16.xpose.msra.mxu0 0
    %278 = vmatprep.subr.bf16.mxu0 0
    %279 = vmatpush1.bf16.xpose.msra.mxu0 0
    %280 = vmatprep.mubr.bf16.mxu0 0
    %281 = vmatmul.mubr.bf16.gmra.mrb[0].mxu0 %v168
    %v282 = vpop.f32.mrb[0].mxu0
    %v283 = vadd.f32 0.0, %v282
    %v284 = vpop.f32.mrb[0].mxu0
    %v285 = vpop.f32.mrb[0].mxu0
    %v286 = vadd.f32 0.0, %v285
    %v287 = vpop.f32.mrb[0].mxu0
    %288 = vmatprep.mubr.bf16.mxu0 0
    %289 = vmatmul.mubr.bf16.gmra.mrb[0].mxu0 %v169
    %v290 = vpop.f32.mrb[0].mxu0
    %v291 = vadd.f32 0.0, %v290
    %v292 = vpop.f32.mrb[0].mxu0
    %v293 = vpop.f32.mrb[0].mxu0
    %v294 = vadd.f32 0.0, %v293
    %v295 = vpop.f32.mrb[0].mxu0
    %296 = vmatprep.mubr.bf16.mxu0 0
    %297 = vmatmul.mubr.bf16.gmra.mrb[0].mxu0 %v170
    %v298 = vpop.f32.mrb[0].mxu0
    %v299 = vadd.f32 0.0, %v298
    %v300 = vpop.f32.mrb[0].mxu0
    %v301 = vpop.f32.mrb[0].mxu0
    %v302 = vadd.f32 0.0, %v301
    %v303 = vpop.f32.mrb[0].mxu0
    %304 = vmatprep.mubr.bf16.mxu0 0
    %305 = vmatmul.mubr.bf16.gmra.mrb[0].mxu0 %v171
    %v306 = vpop.f32.mrb[0].mxu0
    %v307 = vadd.f32 0.0, %v306
    %v308 = vpop.f32.mrb[0].mxu0
    %v309 = vpop.f32.mrb[0].mxu0
    %v310 = vadd.f32 0.0, %v309
    %v311 = vpop.f32.mrb[0].mxu0
    %312 = vmatprep.mubr.bf16.mxu0 0
    %313 = vmatmul.mubr.bf16.gmra.mrb[0].mxu0 %v172
    %v314 = vpop.f32.mrb[0].mxu0
    %v315 = vadd.f32 0.0, %v314
    %v316 = vpop.f32.mrb[0].mxu0
    %v317 = vpop.f32.mrb[0].mxu0
    %v318 = vadd.f32 0.0, %v317
    %v319 = vpop.f32.mrb[0].mxu0
    %320 = vmatprep.mubr.bf16.mxu0 0
    %321 = vmatmul.mubr.bf16.gmra.mrb[0].mxu0 %v173
    %v322 = vpop.f32.mrb[0].mxu0
    %v323 = vadd.f32 0.0, %v322
    %v324 = vpop.f32.mrb[0].mxu0
    %v325 = vpop.f32.mrb[0].mxu0
    %v326 = vadd.f32 0.0, %v325
    %v327 = vpop.f32.mrb[0].mxu0
    %328 = vmatprep.mubr.bf16.mxu0 0
    %329 = vmatmul.mubr.bf16.gmra.mrb[0].mxu0 %v174
    %v330 = vpop.f32.mrb[0].mxu0
    %v331 = vadd.f32 0.0, %v330
    %v332 = vpop.f32.mrb[0].mxu0
    %v333 = vpop.f32.mrb[0].mxu0
    %v334 = vadd.f32 0.0, %v333
    %v335 = vpop.f32.mrb[0].mxu0
    %336 = vmatprep.mubr.bf16.mxu0 0
    %337 = vmatmul.mubr.bf16.gmra.mrb[0].mxu0 %v175
    %v338 = vpop.f32.mrb[0].mxu0
    %v339 = vadd.f32 0.0, %v338
    %v340 = vpop.f32.mrb[0].mxu0
    %v341 = vpop.f32.mrb[0].mxu0
    %v342 = vadd.f32 0.0, %v341
    %v343 = vpop.f32.mrb[0].mxu0
    %344 = vmatprep.mubr.bf16.mxu0 0
    %345 = vmatmul.mubr.bf16.gmra.mrb[0].mxu0 %v176
    %v346 = vpop.f32.mrb[0].mxu0
    %v347 = vadd.f32 0.0, %v346
    %v348 = vpop.f32.mrb[0].mxu0
    %v349 = vpop.f32.mrb[0].mxu0
    %v350 = vadd.f32 0.0, %v349
    %v351 = vpop.f32.mrb[0].mxu0
    %352 = vmatprep.mubr.bf16.mxu0 0
    %353 = vmatmul.mubr.bf16.gmra.mrb[0].mxu0 %v177
    %v354 = vpop.f32.mrb[0].mxu0
    %v355 = vadd.f32 0.0, %v354
    %v356 = vpop.f32.mrb[0].mxu0
    %v357 = vpop.f32.mrb[0].mxu0
    %v358 = vadd.f32 0.0, %v357
    %v359 = vpop.f32.mrb[0].mxu0
    %360 = vmatprep.mubr.bf16.mxu0 0
    %361 = vmatmul.mubr.bf16.gmra.mrb[0].mxu0 %v178
    %v362 = vpop.f32.mrb[0].mxu0
    %v363 = vadd.f32 0.0, %v362
    %v364 = vpop.f32.mrb[0].mxu0
    %v365 = vpop.f32.mrb[0].mxu0
    %v366 = vadd.f32 0.0, %v365
    %v367 = vpop.f32.mrb[0].mxu0
    %368 = vmatprep.mubr.bf16.mxu0 0
    %369 = vmatmul.mubr.bf16.gmra.mrb[0].mxu0 %v179
    %v370 = vpop.f32.mrb[0].mxu0
    %v371 = vadd.f32 0.0, %v370
    %v372 = vpop.f32.mrb[0].mxu0
    %v373 = vpop.f32.mrb[0].mxu0
    %v374 = vadd.f32 0.0, %v373
    %v375 = vpop.f32.mrb[0].mxu0
    %376 = vmatprep.mubr.bf16.mxu0 0
    %377 = vmatmul.mubr.bf16.gmra.mrb[0].mxu0 %v180
    %v378 = vpop.f32.mrb[0].mxu0
    %v379 = vadd.f32 0.0, %v378
    %v380 = vpop.f32.mrb[0].mxu0
    %v381 = vpop.f32.mrb[0].mxu0
    %v382 = vadd.f32 0.0, %v381
    %v383 = vpop.f32.mrb[0].mxu0
    %384 = vmatprep.mubr.bf16.mxu0 0
    %385 = vmatmul.mubr.bf16.gmra.mrb[0].mxu0 %v181
    %v386 = vpop.f32.mrb[0].mxu0
    %v387 = vadd.f32 0.0, %v386
    %v388 = vpop.f32.mrb[0].mxu0
    %v389 = vpop.f32.mrb[0].mxu0
    %v390 = vadd.f32 0.0, %v389
    %v391 = vpop.f32.mrb[0].mxu0
    %392 = vmatprep.mubr.bf16.mxu0 0
    %393 = vmatmul.mubr.bf16.gmra.mrb[0].mxu0 %v182
    %v394 = vpop.f32.mrb[0].mxu0
    %v395 = vadd.f32 0.0, %v394
    %v396 = vpop.f32.mrb[0].mxu0
    %v397 = vpop.f32.mrb[0].mxu0
    %v398 = vadd.f32 0.0, %v397
    %v399 = vpop.f32.mrb[0].mxu0
    %400 = vmatprep.mubr.bf16.mxu0 0
    %401 = vmatmul.mubr.bf16.gmra.mrb[0].mxu0 %v183
    %v402 = vpop.f32.mrb[0].mxu0
    %v403 = vadd.f32 0.0, %v402
    %v404 = vpop.f32.mrb[0].mxu0
    %v405 = vpop.f32.mrb[0].mxu0
    %v406 = vadd.f32 0.0, %v405
    %v407 = vpop.f32.mrb[0].mxu0
    %408 = vdwg.mxu0
    %s409 = scalar_lea.vmem [#allocation3], %s55
    %410 = vst [vmem:[%s409] sm:$0xff] %v283
    %411 = vst [vmem:[%s409 + $0x8] sm:$0xff] %v286
    %412 = vst [vmem:[%s409 + $0x10] sm:$0xff] %v291
    %413 = vst [vmem:[%s409 + $0x18] sm:$0xff] %v294
    %414 = vst [vmem:[%s409 + $0x20] sm:$0xff] %v299
    %415 = vst [vmem:[%s409 + $0x28] sm:$0xff] %v302
    %416 = vst [vmem:[%s409 + $0x30] sm:$0xff] %v307
    %417 = vst [vmem:[%s409 + $0x38] sm:$0xff] %v310
    %418 = vst [vmem:[%s409 + $0x40] sm:$0xff] %v315
    %419 = vst [vmem:[%s409 + $0x48] sm:$0xff] %v318
    %420 = vst [vmem:[%s409 + $0x50] sm:$0xff] %v323
    %421 = vst [vmem:[%s409 + $0x58] sm:$0xff] %v326
    %422 = vst [vmem:[%s409 + $0x60] sm:$0xff] %v331
    %423 = vst [vmem:[%s409 + $0x68] sm:$0xff] %v334
    %424 = vst [vmem:[%s409 + $0x70] sm:$0xff] %v339
    %425 = vst [vmem:[%s409 + $0x78] sm:$0xff] %v342
    %426 = vst [vmem:[%s409 + $0x80] sm:$0xff] %v347
    %427 = vst [vmem:[%s409 + $0x88] sm:$0xff] %v350
    %428 = vst [vmem:[%s409 + $0x90] sm:$0xff] %v355
    %429 = vst [vmem:[%s409 + $0x98] sm:$0xff] %v358
    %430 = vst [vmem:[%s409 + $0xa0] sm:$0xff] %v363
    %431 = vst [vmem:[%s409 + $0xa8] sm:$0xff] %v366
    %432 = vst [vmem:[%s409 + $0xb0] sm:$0xff] %v371
    %433 = vst [vmem:[%s409 + $0xb8] sm:$0xff] %v374
    %434 = vst [vmem:[%s409 + $0xc0] sm:$0xff] %v379
    %435 = vst [vmem:[%s409 + $0xc8] sm:$0xff] %v382
    %436 = vst [vmem:[%s409 + $0xd0] sm:$0xff] %v387
    %437 = vst [vmem:[%s409 + $0xd8] sm:$0xff] %v390
    %438 = vst [vmem:[%s409 + $0xe0] sm:$0xff] %v395
    %439 = vst [vmem:[%s409 + $0xe8] sm:$0xff] %v398
    %440 = vst [vmem:[%s409 + $0xf0] sm:$0xff] %v403
    %441 = vst [vmem:[%s409 + $0xf8] sm:$0xff] %v406
    %v442 = vmul.f32 %v283, 1.442695
    %v443 = vpow.pop %v442
    %v444 = vmul.f32 %v286, 1.442695
    %v445 = vpow.pop %v444
    %v446 = vmul.f32 %v291, 1.442695
    %v447 = vpow.pop %v446
    %v448 = vmul.f32 %v294, 1.442695
    %v449 = vpow.pop %v448
    %v450 = vmul.f32 %v299, 1.442695
    %v451 = vpow.pop %v450
    %v452 = vmul.f32 %v302, 1.442695
    %v453 = vpow.pop %v452
    %v454 = vmul.f32 %v307, 1.442695
    %v455 = vpow.pop %v454
    %v456 = vmul.f32 %v310, 1.442695
    %v457 = vpow.pop %v456
    %v458 = vmul.f32 %v315, 1.442695
    %v459 = vpow.pop %v458
    %v460 = vmul.f32 %v318, 1.442695
    %v461 = vpow.pop %v460
    %v462 = vmul.f32 %v323, 1.442695
    %v463 = vpow.pop %v462
    %v464 = vmul.f32 %v326, 1.442695
    %v465 = vpow.pop %v464
    %v466 = vmul.f32 %v331, 1.442695
    %v467 = vpow.pop %v466
    %v468 = vmul.f32 %v334, 1.442695
    %v469 = vpow.pop %v468
    %v470 = vmul.f32 %v339, 1.442695
    %v471 = vpow.pop %v470
    %v472 = vmul.f32 %v342, 1.442695
    %v473 = vpow.pop %v472
    %v474 = vmul.f32 %v347, 1.442695
    %v475 = vpow.pop %v474
    %v476 = vmul.f32 %v350, 1.442695
    %v477 = vpow.pop %v476
    %v478 = vmul.f32 %v355, 1.442695
    %v479 = vpow.pop %v478
    %v480 = vmul.f32 %v358, 1.442695
    %v481 = vpow.pop %v480
    %v482 = vmul.f32 %v363, 1.442695
    %v483 = vpow.pop %v482
    %v484 = vmul.f32 %v366, 1.442695
    %v485 = vpow.pop %v484
    %v486 = vmul.f32 %v371, 1.442695
    %v487 = vpow.pop %v486
    %v488 = vmul.f32 %v374, 1.442695
    %v489 = vpow.pop %v488
    %v490 = vmul.f32 %v379, 1.442695
    %v491 = vpow.pop %v490
    %v492 = vmul.f32 %v382, 1.442695
    %v493 = vpow.pop %v492
    %v494 = vmul.f32 %v387, 1.442695
    %v495 = vpow.pop %v494
    %v496 = vmul.f32 %v390, 1.442695
    %v497 = vpow.pop %v496
    %v498 = vmul.f32 %v395, 1.442695
    %v499 = vpow.pop %v498
    %v500 = vmul.f32 %v398, 1.442695
    %v501 = vpow.pop %v500
    %v502 = vmul.f32 %v403, 1.442695
    %v503 = vpow.pop %v502
    %v504 = vmul.f32 %v406, 1.442695
    %v505 = vpow.pop %v504
    %v506 = vpack.c.bf16 %v445, %v443
    %v507 = vpack.c.bf16 %v449, %v447
    %v508 = vpack.c.bf16 %v453, %v451
    %v509 = vpack.c.bf16 %v457, %v455
    %v510 = vpack.c.bf16 %v461, %v459
    %v511 = vpack.c.bf16 %v465, %v463
    %v512 = vpack.c.bf16 %v469, %v467
    %v513 = vpack.c.bf16 %v473, %v471
    %v514 = vpack.c.bf16 %v477, %v475
    %v515 = vpack.c.bf16 %v481, %v479
    %v516 = vpack.c.bf16 %v485, %v483
    %v517 = vpack.c.bf16 %v489, %v487
    %v518 = vpack.c.bf16 %v493, %v491
    %v519 = vpack.c.bf16 %v497, %v495
    %v520 = vpack.c.bf16 %v501, %v499
    %v521 = vpack.c.bf16 %v505, %v503
    %v522 = vlaneseq
    %v523 = vand.u32 %v522, 127
    %v524 = vadd.s32 %v523, 128
    %v525 = vstv %s55
    %v526 = vadd.s32 %v523, %v525
    %v527 = vadd.s32 %v524, %v525
    %vm528 = vcmp.lt.s32.totalorder %v526, 6
    %vm529 = vcmp.lt.s32.totalorder %v527, 6
    %v530 = vld [vmem:[%s2] sm:$0xff]
    %v531 = vld [vmem:[%s2 + $0x8] sm:$0xff]
    %v532 = vld [vmem:[%s2 + $0x10] sm:$0xff]
    %v533 = vld [vmem:[%s2 + $0x18] sm:$0xff]
    %v534 = vld [vmem:[%s2 + $0x20] sm:$0xff]
    %v535 = vld [vmem:[%s2 + $0x28] sm:$0xff]
    %v536 = vld [vmem:[%s2 + $0x30] sm:$0xff]
    %v537 = vld [vmem:[%s2 + $0x38] sm:$0xff]
    %v538 = vld [vmem:[%s2 + $0x40] sm:$0xff]
    %v539 = vld [vmem:[%s2 + $0x48] sm:$0xff]
    %v540 = vld [vmem:[%s2 + $0x50] sm:$0xff]
    %v541 = vld [vmem:[%s2 + $0x58] sm:$0xff]
    %v542 = vld [vmem:[%s2 + $0x60] sm:$0xff]
    %v543 = vld [vmem:[%s2 + $0x68] sm:$0xff]
    %v544 = vld [vmem:[%s2 + $0x70] sm:$0xff]
    %v545 = vld [vmem:[%s2 + $0x78] sm:$0xff]
    %v546 = vld [vmem:[%s2 + $0x80] sm:$0xff]
    %v547 = vld [vmem:[%s2 + $0x88] sm:$0xff]
    %v548 = vld [vmem:[%s2 + $0x90] sm:$0xff]
    %v549 = vld [vmem:[%s2 + $0x98] sm:$0xff]
    %v550 = vld [vmem:[%s2 + $0xa0] sm:$0xff]
    %v551 = vld [vmem:[%s2 + $0xa8] sm:$0xff]
    %v552 = vld [vmem:[%s2 + $0xb0] sm:$0xff]
    %v553 = vld [vmem:[%s2 + $0xb8] sm:$0xff]
    %v554 = vld [vmem:[%s2 + $0xc0] sm:$0xff]
    %v555 = vld [vmem:[%s2 + $0xc8] sm:$0xff]
    %v556 = vld [vmem:[%s2 + $0xd0] sm:$0xff]
    %v557 = vld [vmem:[%s2 + $0xd8] sm:$0xff]
    %v558 = vld [vmem:[%s2 + $0xe0] sm:$0xff]
    %v559 = vld [vmem:[%s2 + $0xe8] sm:$0xff]
    %v560 = vld [vmem:[%s2 + $0xf0] sm:$0xff]
    %v561 = vld [vmem:[%s2 + $0xf8] sm:$0xff]
    %562 = vset.pattern.permute.xlu0 0
    %563 = vperm.xlu0 %562, %v530
    %v564 = vpop.permute.xlu0 %563
    %565 = vset.pattern.permute.xlu0 0
    %566 = vperm.xlu0 %565, %v531
    %v567 = vpop.permute.xlu0 %566
    %568 = vset.pattern.permute.xlu0 0
    %569 = vperm.xlu0 %568, %v532
    %v570 = vpop.permute.xlu0 %569
    %571 = vset.pattern.permute.xlu0 0
    %572 = vperm.xlu0 %571, %v533
    %v573 = vpop.permute.xlu0 %572
    %574 = vset.pattern.permute.xlu0 0
    %575 = vperm.xlu0 %574, %v534
    %v576 = vpop.permute.xlu0 %575
    %577 = vset.pattern.permute.xlu0 0
    %578 = vperm.xlu0 %577, %v535
    %v579 = vpop.permute.xlu0 %578
    %580 = vset.pattern.permute.xlu0 0
    %581 = vperm.xlu0 %580, %v536
    %v582 = vpop.permute.xlu0 %581
    %583 = vset.pattern.permute.xlu0 0
    %584 = vperm.xlu0 %583, %v537
    %v585 = vpop.permute.xlu0 %584
    %586 = vset.pattern.permute.xlu0 0
    %587 = vperm.xlu0 %586, %v538
    %v588 = vpop.permute.xlu0 %587
    %589 = vset.pattern.permute.xlu0 0
    %590 = vperm.xlu0 %589, %v539
    %v591 = vpop.permute.xlu0 %590
    %592 = vset.pattern.permute.xlu0 0
    %593 = vperm.xlu0 %592, %v540
    %v594 = vpop.permute.xlu0 %593
    %595 = vset.pattern.permute.xlu0 0
    %596 = vperm.xlu0 %595, %v541
    %v597 = vpop.permute.xlu0 %596
    %598 = vset.pattern.permute.xlu0 0
    %599 = vperm.xlu0 %598, %v542
    %v600 = vpop.permute.xlu0 %599
    %601 = vset.pattern.permute.xlu0 0
    %602 = vperm.xlu0 %601, %v543
    %v603 = vpop.permute.xlu0 %602
    %604 = vset.pattern.permute.xlu0 0
    %605 = vperm.xlu0 %604, %v544
    %v606 = vpop.permute.xlu0 %605
    %607 = vset.pattern.permute.xlu0 0
    %608 = vperm.xlu0 %607, %v545
    %v609 = vpop.permute.xlu0 %608
    %610 = vset.pattern.permute.xlu0 0
    %611 = vperm.xlu0 %610, %v546
    %v612 = vpop.permute.xlu0 %611
    %613 = vset.pattern.permute.xlu0 0
    %614 = vperm.xlu0 %613, %v547
    %v615 = vpop.permute.xlu0 %614
    %616 = vset.pattern.permute.xlu0 0
    %617 = vperm.xlu0 %616, %v548
    %v618 = vpop.permute.xlu0 %617
    %619 = vset.pattern.permute.xlu0 0
    %620 = vperm.xlu0 %619, %v549
    %v621 = vpop.permute.xlu0 %620
    %622 = vset.pattern.permute.xlu0 0
    %623 = vperm.xlu0 %622, %v550
    %v624 = vpop.permute.xlu0 %623
    %625 = vset.pattern.permute.xlu0 0
    %626 = vperm.xlu0 %625, %v551
    %v627 = vpop.permute.xlu0 %626
    %628 = vset.pattern.permute.xlu0 0
    %629 = vperm.xlu0 %628, %v552
    %v630 = vpop.permute.xlu0 %629
    %631 = vset.pattern.permute.xlu0 0
    %632 = vperm.xlu0 %631, %v553
    %v633 = vpop.permute.xlu0 %632
    %634 = vset.pattern.permute.xlu0 0
    %635 = vperm.xlu0 %634, %v554
    %v636 = vpop.permute.xlu0 %635
    %637 = vset.pattern.permute.xlu0 0
    %638 = vperm.xlu0 %637, %v555
    %v639 = vpop.permute.xlu0 %638
    %640 = vset.pattern.permute.xlu0 0
    %641 = vperm.xlu0 %640, %v556
    %v642 = vpop.permute.xlu0 %641
    %643 = vset.pattern.permute.xlu0 0
    %644 = vperm.xlu0 %643, %v557
    %v645 = vpop.permute.xlu0 %644
    %646 = vset.pattern.permute.xlu0 0
    %647 = vperm.xlu0 %646, %v558
    %v648 = vpop.permute.xlu0 %647
    %649 = vset.pattern.permute.xlu0 0
    %650 = vperm.xlu0 %649, %v559
    %v651 = vpop.permute.xlu0 %650
    %652 = vset.pattern.permute.xlu0 0
    %653 = vperm.xlu0 %652, %v560
    %v654 = vpop.permute.xlu0 %653
    %655 = vset.pattern.permute.xlu0 0
    %656 = vperm.xlu0 %655, %v561
    %v657 = vpop.permute.xlu0 %656
    %vm658 = vcmp.ne.s32.totalorder %v526, %v564
    %vm659 = vcmp.ne.s32.totalorder %v527, %v564
    %vm660 = vcmp.ne.s32.totalorder %v526, %v567
    %vm661 = vcmp.ne.s32.totalorder %v527, %v567
    %vm662 = vcmp.ne.s32.totalorder %v526, %v570
    %vm663 = vcmp.ne.s32.totalorder %v527, %v570
    %vm664 = vcmp.ne.s32.totalorder %v526, %v573
    %vm665 = vcmp.ne.s32.totalorder %v527, %v573
    %vm666 = vcmp.ne.s32.totalorder %v526, %v576
    %vm667 = vcmp.ne.s32.totalorder %v527, %v576
    %vm668 = vcmp.ne.s32.totalorder %v526, %v579
    %vm669 = vcmp.ne.s32.totalorder %v527, %v579
    %vm670 = vcmp.ne.s32.totalorder %v526, %v582
    %vm671 = vcmp.ne.s32.totalorder %v527, %v582
    %vm672 = vcmp.ne.s32.totalorder %v526, %v585
    %vm673 = vcmp.ne.s32.totalorder %v527, %v585
    %vm674 = vcmp.ne.s32.totalorder %v526, %v588
    %vm675 = vcmp.ne.s32.totalorder %v527, %v588
    %vm676 = vcmp.ne.s32.totalorder %v526, %v591
    %vm677 = vcmp.ne.s32.totalorder %v527, %v591
    %vm678 = vcmp.ne.s32.totalorder %v526, %v594
    %vm679 = vcmp.ne.s32.totalorder %v527, %v594
    %vm680 = vcmp.ne.s32.totalorder %v526, %v597
    %vm681 = vcmp.ne.s32.totalorder %v527, %v597
    %vm682 = vcmp.ne.s32.totalorder %v526, %v600
    %vm683 = vcmp.ne.s32.totalorder %v527, %v600
    %vm684 = vcmp.ne.s32.totalorder %v526, %v603
    %vm685 = vcmp.ne.s32.totalorder %v527, %v603
    %vm686 = vcmp.ne.s32.totalorder %v526, %v606
    %vm687 = vcmp.ne.s32.totalorder %v527, %v606
    %vm688 = vcmp.ne.s32.totalorder %v526, %v609
    %vm689 = vcmp.ne.s32.totalorder %v527, %v609
    %vm690 = vcmp.ne.s32.totalorder %v526, %v612
    %vm691 = vcmp.ne.s32.totalorder %v527, %v612
    %vm692 = vcmp.ne.s32.totalorder %v526, %v615
    %vm693 = vcmp.ne.s32.totalorder %v527, %v615
    %vm694 = vcmp.ne.s32.totalorder %v526, %v618
    %vm695 = vcmp.ne.s32.totalorder %v527, %v618
    %vm696 = vcmp.ne.s32.totalorder %v526, %v621
    %vm697 = vcmp.ne.s32.totalorder %v527, %v621
    %vm698 = vcmp.ne.s32.totalorder %v526, %v624
    %vm699 = vcmp.ne.s32.totalorder %v527, %v624
    %vm700 = vcmp.ne.s32.totalorder %v526, %v627
    %vm701 = vcmp.ne.s32.totalorder %v527, %v627
    %vm702 = vcmp.ne.s32.totalorder %v526, %v630
    %vm703 = vcmp.ne.s32.totalorder %v527, %v630
    %vm704 = vcmp.ne.s32.totalorder %v526, %v633
    %vm705 = vcmp.ne.s32.totalorder %v527, %v633
    %vm706 = vcmp.ne.s32.totalorder %v526, %v636
    %vm707 = vcmp.ne.s32.totalorder %v527, %v636
    %vm708 = vcmp.ne.s32.totalorder %v526, %v639
    %vm709 = vcmp.ne.s32.totalorder %v527, %v639
    %vm710 = vcmp.ne.s32.totalorder %v526, %v642
    %vm711 = vcmp.ne.s32.totalorder %v527, %v642
    %vm712 = vcmp.ne.s32.totalorder %v526, %v645
    %vm713 = vcmp.ne.s32.totalorder %v527, %v645
    %vm714 = vcmp.ne.s32.totalorder %v526, %v648
    %vm715 = vcmp.ne.s32.totalorder %v527, %v648
    %vm716 = vcmp.ne.s32.totalorder %v526, %v651
    %vm717 = vcmp.ne.s32.totalorder %v527, %v651
    %vm718 = vcmp.ne.s32.totalorder %v526, %v654
    %vm719 = vcmp.ne.s32.totalorder %v527, %v654
    %vm720 = vcmp.ne.s32.totalorder %v526, %v657
    %vm721 = vcmp.ne.s32.totalorder %v527, %v657
    %vm722 = vmand %vm528, %vm658
    %vm723 = vmand %vm529, %vm659
    %vm724 = vmand %vm528, %vm660
    %vm725 = vmand %vm529, %vm661
    %vm726 = vmand %vm528, %vm662
    %vm727 = vmand %vm529, %vm663
    %vm728 = vmand %vm528, %vm664
    %vm729 = vmand %vm529, %vm665
    %vm730 = vmand %vm528, %vm666
    %vm731 = vmand %vm529, %vm667
    %vm732 = vmand %vm528, %vm668
    %vm733 = vmand %vm529, %vm669
    %vm734 = vmand %vm528, %vm670
    %vm735 = vmand %vm529, %vm671
    %vm736 = vmand %vm528, %vm672
    %vm737 = vmand %vm529, %vm673
    %vm738 = vmand %vm528, %vm674
    %vm739 = vmand %vm529, %vm675
    %vm740 = vmand %vm528, %vm676
    %vm741 = vmand %vm529, %vm677
    %vm742 = vmand %vm528, %vm678
    %vm743 = vmand %vm529, %vm679
    %vm744 = vmand %vm528, %vm680
    %vm745 = vmand %vm529, %vm681
    %vm746 = vmand %vm528, %vm682
    %vm747 = vmand %vm529, %vm683
    %vm748 = vmand %vm528, %vm684
    %vm749 = vmand %vm529, %vm685
    %vm750 = vmand %vm528, %vm686
    %vm751 = vmand %vm529, %vm687
    %vm752 = vmand %vm528, %vm688
    %vm753 = vmand %vm529, %vm689
    %vm754 = vmand %vm528, %vm690
    %vm755 = vmand %vm529, %vm691
    %vm756 = vmand %vm528, %vm692
    %vm757 = vmand %vm529, %vm693
    %vm758 = vmand %vm528, %vm694
    %vm759 = vmand %vm529, %vm695
    %vm760 = vmand %vm528, %vm696
    %vm761 = vmand %vm529, %vm697
    %vm762 = vmand %vm528, %vm698
    %vm763 = vmand %vm529, %vm699
    %vm764 = vmand %vm528, %vm700
    %vm765 = vmand %vm529, %vm701
    %vm766 = vmand %vm528, %vm702
    %vm767 = vmand %vm529, %vm703
    %vm768 = vmand %vm528, %vm704
    %vm769 = vmand %vm529, %vm705
    %vm770 = vmand %vm528, %vm706
    %vm771 = vmand %vm529, %vm707
    %vm772 = vmand %vm528, %vm708
    %vm773 = vmand %vm529, %vm709
    %vm774 = vmand %vm528, %vm710
    %vm775 = vmand %vm529, %vm711
    %vm776 = vmand %vm528, %vm712
    %vm777 = vmand %vm529, %vm713
    %vm778 = vmand %vm528, %vm714
    %vm779 = vmand %vm529, %vm715
    %vm780 = vmand %vm528, %vm716
    %vm781 = vmand %vm529, %vm717
    %vm782 = vmand %vm528, %vm718
    %vm783 = vmand %vm529, %vm719
    %vm784 = vmand %vm528, %vm720
    %vm785 = vmand %vm529, %vm721
    %786 = vset.pattern.permute.xlu0 1
    %787 = vperm.xlu0 %786, %v530
    %v788 = vpop.permute.xlu0 %787
    %789 = vset.pattern.permute.xlu0 1
    %790 = vperm.xlu0 %789, %v531
    %v791 = vpop.permute.xlu0 %790
    %792 = vset.pattern.permute.xlu0 1
    %793 = vperm.xlu0 %792, %v532
    %v794 = vpop.permute.xlu0 %793
    %795 = vset.pattern.permute.xlu0 1
    %796 = vperm.xlu0 %795, %v533
    %v797 = vpop.permute.xlu0 %796
    %798 = vset.pattern.permute.xlu0 1
    %799 = vperm.xlu0 %798, %v534
    %v800 = vpop.permute.xlu0 %799
    %801 = vset.pattern.permute.xlu0 1
    %802 = vperm.xlu0 %801, %v535
    %v803 = vpop.permute.xlu0 %802
    %804 = vset.pattern.permute.xlu0 1
    %805 = vperm.xlu0 %804, %v536
    %v806 = vpop.permute.xlu0 %805
    %807 = vset.pattern.permute.xlu0 1
    %808 = vperm.xlu0 %807, %v537
    %v809 = vpop.permute.xlu0 %808
    %810 = vset.pattern.permute.xlu0 1
    %811 = vperm.xlu0 %810, %v538
    %v812 = vpop.permute.xlu0 %811
    %813 = vset.pattern.permute.xlu0 1
    %814 = vperm.xlu0 %813, %v539
    %v815 = vpop.permute.xlu0 %814
    %816 = vset.pattern.permute.xlu0 1
    %817 = vperm.xlu0 %816, %v540
    %v818 = vpop.permute.xlu0 %817
    %819 = vset.pattern.permute.xlu0 1
    %820 = vperm.xlu0 %819, %v541
    %v821 = vpop.permute.xlu0 %820
    %822 = vset.pattern.permute.xlu0 1
    %823 = vperm.xlu0 %822, %v542
    %v824 = vpop.permute.xlu0 %823
    %825 = vset.pattern.permute.xlu0 1
    %826 = vperm.xlu0 %825, %v543
    %v827 = vpop.permute.xlu0 %826
    %828 = vset.pattern.permute.xlu0 1
    %829 = vperm.xlu0 %828, %v544
    %v830 = vpop.permute.xlu0 %829
    %831 = vset.pattern.permute.xlu0 1
    %832 = vperm.xlu0 %831, %v545
    %v833 = vpop.permute.xlu0 %832
    %834 = vset.pattern.permute.xlu0 1
    %835 = vperm.xlu0 %834, %v546
    %v836 = vpop.permute.xlu0 %835
    %837 = vset.pattern.permute.xlu0 1
    %838 = vperm.xlu0 %837, %v547
    %v839 = vpop.permute.xlu0 %838
    %840 = vset.pattern.permute.xlu0 1
    %841 = vperm.xlu0 %840, %v548
    %v842 = vpop.permute.xlu0 %841
    %843 = vset.pattern.permute.xlu0 1
    %844 = vperm.xlu0 %843, %v549
    %v845 = vpop.permute.xlu0 %844
    %846 = vset.pattern.permute.xlu0 1
    %847 = vperm.xlu0 %846, %v550
    %v848 = vpop.permute.xlu0 %847
    %849 = vset.pattern.permute.xlu0 1
    %850 = vperm.xlu0 %849, %v551
    %v851 = vpop.permute.xlu0 %850
    %852 = vset.pattern.permute.xlu0 1
    %853 = vperm.xlu0 %852, %v552
    %v854 = vpop.permute.xlu0 %853
    %855 = vset.pattern.permute.xlu0 1
    %856 = vperm.xlu0 %855, %v553
    %v857 = vpop.permute.xlu0 %856
    %858 = vset.pattern.permute.xlu0 1
    %859 = vperm.xlu0 %858, %v554
    %v860 = vpop.permute.xlu0 %859
    %861 = vset.pattern.permute.xlu0 1
    %862 = vperm.xlu0 %861, %v555
    %v863 = vpop.permute.xlu0 %862
    %864 = vset.pattern.permute.xlu0 1
    %865 = vperm.xlu0 %864, %v556
    %v866 = vpop.permute.xlu0 %865
    %867 = vset.pattern.permute.xlu0 1
    %868 = vperm.xlu0 %867, %v557
    %v869 = vpop.permute.xlu0 %868
    %870 = vset.pattern.permute.xlu0 1
    %871 = vperm.xlu0 %870, %v558
    %v872 = vpop.permute.xlu0 %871
    %873 = vset.pattern.permute.xlu0 1
    %874 = vperm.xlu0 %873, %v559
    %v875 = vpop.permute.xlu0 %874
    %876 = vset.pattern.permute.xlu0 1
    %877 = vperm.xlu0 %876, %v560
    %v878 = vpop.permute.xlu0 %877
    %879 = vset.pattern.permute.xlu0 1
    %880 = vperm.xlu0 %879, %v561
    %v881 = vpop.permute.xlu0 %880
    %vm882 = vcmp.ne.s32.totalorder %v526, %v788
    %vm883 = vcmp.ne.s32.totalorder %v527, %v788
    %vm884 = vcmp.ne.s32.totalorder %v526, %v791
    %vm885 = vcmp.ne.s32.totalorder %v527, %v791
    %vm886 = vcmp.ne.s32.totalorder %v526, %v794
    %vm887 = vcmp.ne.s32.totalorder %v527, %v794
    %vm888 = vcmp.ne.s32.totalorder %v526, %v797
    %vm889 = vcmp.ne.s32.totalorder %v527, %v797
    %vm890 = vcmp.ne.s32.totalorder %v526, %v800
    %vm891 = vcmp.ne.s32.totalorder %v527, %v800
    %vm892 = vcmp.ne.s32.totalorder %v526, %v803
    %vm893 = vcmp.ne.s32.totalorder %v527, %v803
    %vm894 = vcmp.ne.s32.totalorder %v526, %v806
    %vm895 = vcmp.ne.s32.totalorder %v527, %v806
    %vm896 = vcmp.ne.s32.totalorder %v526, %v809
    %vm897 = vcmp.ne.s32.totalorder %v527, %v809
    %vm898 = vcmp.ne.s32.totalorder %v526, %v812
    %vm899 = vcmp.ne.s32.totalorder %v527, %v812
    %vm900 = vcmp.ne.s32.totalorder %v526, %v815
    %vm901 = vcmp.ne.s32.totalorder %v527, %v815
    %vm902 = vcmp.ne.s32.totalorder %v526, %v818
    %vm903 = vcmp.ne.s32.totalorder %v527, %v818
    %vm904 = vcmp.ne.s32.totalorder %v526, %v821
    %vm905 = vcmp.ne.s32.totalorder %v527, %v821
    %vm906 = vcmp.ne.s32.totalorder %v526, %v824
    %vm907 = vcmp.ne.s32.totalorder %v527, %v824
    %vm908 = vcmp.ne.s32.totalorder %v526, %v827
    %vm909 = vcmp.ne.s32.totalorder %v527, %v827
    %vm910 = vcmp.ne.s32.totalorder %v526, %v830
    %vm911 = vcmp.ne.s32.totalorder %v527, %v830
    %vm912 = vcmp.ne.s32.totalorder %v526, %v833
    %vm913 = vcmp.ne.s32.totalorder %v527, %v833
    %vm914 = vcmp.ne.s32.totalorder %v526, %v836
    %vm915 = vcmp.ne.s32.totalorder %v527, %v836
    %vm916 = vcmp.ne.s32.totalorder %v526, %v839
    %vm917 = vcmp.ne.s32.totalorder %v527, %v839
    %vm918 = vcmp.ne.s32.totalorder %v526, %v842
    %vm919 = vcmp.ne.s32.totalorder %v527, %v842
    %vm920 = vcmp.ne.s32.totalorder %v526, %v845
    %vm921 = vcmp.ne.s32.totalorder %v527, %v845
    %vm922 = vcmp.ne.s32.totalorder %v526, %v848
    %vm923 = vcmp.ne.s32.totalorder %v527, %v848
    %vm924 = vcmp.ne.s32.totalorder %v526, %v851
    %vm925 = vcmp.ne.s32.totalorder %v527, %v851
    %vm926 = vcmp.ne.s32.totalorder %v526, %v854
    %vm927 = vcmp.ne.s32.totalorder %v527, %v854
    %vm928 = vcmp.ne.s32.totalorder %v526, %v857
    %vm929 = vcmp.ne.s32.totalorder %v527, %v857
    %vm930 = vcmp.ne.s32.totalorder %v526, %v860
    %vm931 = vcmp.ne.s32.totalorder %v527, %v860
    %vm932 = vcmp.ne.s32.totalorder %v526, %v863
    %vm933 = vcmp.ne.s32.totalorder %v527, %v863
    %vm934 = vcmp.ne.s32.totalorder %v526, %v866
    %vm935 = vcmp.ne.s32.totalorder %v527, %v866
    %vm936 = vcmp.ne.s32.totalorder %v526, %v869
    %vm937 = vcmp.ne.s32.totalorder %v527, %v869
    %vm938 = vcmp.ne.s32.totalorder %v526, %v872
    %vm939 = vcmp.ne.s32.totalorder %v527, %v872
    %vm940 = vcmp.ne.s32.totalorder %v526, %v875
    %vm941 = vcmp.ne.s32.totalorder %v527, %v875
    %vm942 = vcmp.ne.s32.totalorder %v526, %v878
    %vm943 = vcmp.ne.s32.totalorder %v527, %v878
    %vm944 = vcmp.ne.s32.totalorder %v526, %v881
    %vm945 = vcmp.ne.s32.totalorder %v527, %v881
    %vm946 = vmand %vm722, %vm882
    %vm947 = vmand %vm723, %vm883
    %vm948 = vmand %vm724, %vm884
    %vm949 = vmand %vm725, %vm885
    %vm950 = vmand %vm726, %vm886
    %vm951 = vmand %vm727, %vm887
    %vm952 = vmand %vm728, %vm888
    %vm953 = vmand %vm729, %vm889
    %vm954 = vmand %vm730, %vm890
    %vm955 = vmand %vm731, %vm891
    %vm956 = vmand %vm732, %vm892
    %vm957 = vmand %vm733, %vm893
    %vm958 = vmand %vm734, %vm894
    %vm959 = vmand %vm735, %vm895
    %vm960 = vmand %vm736, %vm896
    %vm961 = vmand %vm737, %vm897
    %vm962 = vmand %vm738, %vm898
    %vm963 = vmand %vm739, %vm899
    %vm964 = vmand %vm740, %vm900
    %vm965 = vmand %vm741, %vm901
    %vm966 = vmand %vm742, %vm902
    %vm967 = vmand %vm743, %vm903
    %vm968 = vmand %vm744, %vm904
    %vm969 = vmand %vm745, %vm905
    %vm970 = vmand %vm746, %vm906
    %vm971 = vmand %vm747, %vm907
    %vm972 = vmand %vm748, %vm908
    %vm973 = vmand %vm749, %vm909
    %vm974 = vmand %vm750, %vm910
    %vm975 = vmand %vm751, %vm911
    %vm976 = vmand %vm752, %vm912
    %vm977 = vmand %vm753, %vm913
    %vm978 = vmand %vm754, %vm914
    %vm979 = vmand %vm755, %vm915
    %vm980 = vmand %vm756, %vm916
    %vm981 = vmand %vm757, %vm917
    %vm982 = vmand %vm758, %vm918
    %vm983 = vmand %vm759, %vm919
    %vm984 = vmand %vm760, %vm920
    %vm985 = vmand %vm761, %vm921
    %vm986 = vmand %vm762, %vm922
    %vm987 = vmand %vm763, %vm923
    %vm988 = vmand %vm764, %vm924
    %vm989 = vmand %vm765, %vm925
    %vm990 = vmand %vm766, %vm926
    %vm991 = vmand %vm767, %vm927
    %vm992 = vmand %vm768, %vm928
    %vm993 = vmand %vm769, %vm929
    %vm994 = vmand %vm770, %vm930
    %vm995 = vmand %vm771, %vm931
    %vm996 = vmand %vm772, %vm932
    %vm997 = vmand %vm773, %vm933
    %vm998 = vmand %vm774, %vm934
    %vm999 = vmand %vm775, %vm935
    %vm1000 = vmand %vm776, %vm936
    %vm1001 = vmand %vm777, %vm937
    %vm1002 = vmand %vm778, %vm938
    %vm1003 = vmand %vm779, %vm939
    %vm1004 = vmand %vm780, %vm940
    %vm1005 = vmand %vm781, %vm941
    %vm1006 = vmand %vm782, %vm942
    %vm1007 = vmand %vm783, %vm943
    %vm1008 = vmand %vm784, %vm944
    %vm1009 = vmand %vm785, %vm945
    %v1010 = vsel %vm946, 1.0, 0.0
    %v1011 = vsel %vm947, 1.0, 0.0
    %v1012 = vsel %vm948, 1.0, 0.0
    %v1013 = vsel %vm949, 1.0, 0.0
    %v1014 = vsel %vm950, 1.0, 0.0
    %v1015 = vsel %vm951, 1.0, 0.0
    %v1016 = vsel %vm952, 1.0, 0.0
    %v1017 = vsel %vm953, 1.0, 0.0
    %v1018 = vsel %vm954, 1.0, 0.0
    %v1019 = vsel %vm955, 1.0, 0.0
    %v1020 = vsel %vm956, 1.0, 0.0
    %v1021 = vsel %vm957, 1.0, 0.0
    %v1022 = vsel %vm958, 1.0, 0.0
    %v1023 = vsel %vm959, 1.0, 0.0
    %v1024 = vsel %vm960, 1.0, 0.0
    %v1025 = vsel %vm961, 1.0, 0.0
    %v1026 = vsel %vm962, 1.0, 0.0
    %v1027 = vsel %vm963, 1.0, 0.0
    %v1028 = vsel %vm964, 1.0, 0.0
    %v1029 = vsel %vm965, 1.0, 0.0
    %v1030 = vsel %vm966, 1.0, 0.0
    %v1031 = vsel %vm967, 1.0, 0.0
    %v1032 = vsel %vm968, 1.0, 0.0
    %v1033 = vsel %vm969, 1.0, 0.0
    %v1034 = vsel %vm970, 1.0, 0.0
    %v1035 = vsel %vm971, 1.0, 0.0
    %v1036 = vsel %vm972, 1.0, 0.0
    %v1037 = vsel %vm973, 1.0, 0.0
    %v1038 = vsel %vm974, 1.0, 0.0
    %v1039 = vsel %vm975, 1.0, 0.0
    %v1040 = vsel %vm976, 1.0, 0.0
    %v1041 = vsel %vm977, 1.0, 0.0
    %v1042 = vsel %vm978, 1.0, 0.0
    %v1043 = vsel %vm979, 1.0, 0.0
    %v1044 = vsel %vm980, 1.0, 0.0
    %v1045 = vsel %vm981, 1.0, 0.0
    %v1046 = vsel %vm982, 1.0, 0.0
    %v1047 = vsel %vm983, 1.0, 0.0
    %v1048 = vsel %vm984, 1.0, 0.0
    %v1049 = vsel %vm985, 1.0, 0.0
    %v1050 = vsel %vm986, 1.0, 0.0
    %v1051 = vsel %vm987, 1.0, 0.0
    %v1052 = vsel %vm988, 1.0, 0.0
    %v1053 = vsel %vm989, 1.0, 0.0
    %v1054 = vsel %vm990, 1.0, 0.0
    %v1055 = vsel %vm991, 1.0, 0.0
    %v1056 = vsel %vm992, 1.0, 0.0
    %v1057 = vsel %vm993, 1.0, 0.0
    %v1058 = vsel %vm994, 1.0, 0.0
    %v1059 = vsel %vm995, 1.0, 0.0
    %v1060 = vsel %vm996, 1.0, 0.0
    %v1061 = vsel %vm997, 1.0, 0.0
    %v1062 = vsel %vm998, 1.0, 0.0
    %v1063 = vsel %vm999, 1.0, 0.0
    %v1064 = vsel %vm1000, 1.0, 0.0
    %v1065 = vsel %vm1001, 1.0, 0.0
    %v1066 = vsel %vm1002, 1.0, 0.0
    %v1067 = vsel %vm1003, 1.0, 0.0
    %v1068 = vsel %vm1004, 1.0, 0.0
    %v1069 = vsel %vm1005, 1.0, 0.0
    %v1070 = vsel %vm1006, 1.0, 0.0
    %v1071 = vsel %vm1007, 1.0, 0.0
    %v1072 = vsel %vm1008, 1.0, 0.0
    %v1073 = vsel %vm1009, 1.0, 0.0
    %v1074 = vpack.c.bf16 %v1012, %v1010
    %v1075 = vpack.c.bf16 %v1013, %v1011
    %v1076 = vpack.c.bf16 %v1016, %v1014
    %v1077 = vpack.c.bf16 %v1017, %v1015
    %v1078 = vpack.c.bf16 %v1020, %v1018
    %v1079 = vpack.c.bf16 %v1021, %v1019
    %v1080 = vpack.c.bf16 %v1024, %v1022
    %v1081 = vpack.c.bf16 %v1025, %v1023
    %v1082 = vpack.c.bf16 %v1028, %v1026
    %v1083 = vpack.c.bf16 %v1029, %v1027
    %v1084 = vpack.c.bf16 %v1032, %v1030
    %v1085 = vpack.c.bf16 %v1033, %v1031
    %v1086 = vpack.c.bf16 %v1036, %v1034
    %v1087 = vpack.c.bf16 %v1037, %v1035
    %v1088 = vpack.c.bf16 %v1040, %v1038
    %v1089 = vpack.c.bf16 %v1041, %v1039
    %v1090 = vpack.c.bf16 %v1044, %v1042
    %v1091 = vpack.c.bf16 %v1045, %v1043
    %v1092 = vpack.c.bf16 %v1048, %v1046
    %v1093 = vpack.c.bf16 %v1049, %v1047
    %v1094 = vpack.c.bf16 %v1052, %v1050
    %v1095 = vpack.c.bf16 %v1053, %v1051
    %v1096 = vpack.c.bf16 %v1056, %v1054
    %v1097 = vpack.c.bf16 %v1057, %v1055
    %v1098 = vpack.c.bf16 %v1060, %v1058
    %v1099 = vpack.c.bf16 %v1061, %v1059
    %v1100 = vpack.c.bf16 %v1064, %v1062
    %v1101 = vpack.c.bf16 %v1065, %v1063
    %v1102 = vpack.c.bf16 %v1068, %v1066
    %v1103 = vpack.c.bf16 %v1069, %v1067
    %v1104 = vpack.c.bf16 %v1072, %v1070
    %v1105 = vpack.c.bf16 %v1073, %v1071
    %v1106 = vld [vmem:[#allocation2] sm:$0xff]
    %v1107 = vld [vmem:[#allocation2 + $0x8] sm:$0xff]
    %v1108 = vld [vmem:[#allocation2 + $0x10] sm:$0xff]
    %v1109 = vld [vmem:[#allocation2 + $0x18] sm:$0xff]
    %v1110 = vld [vmem:[#allocation2 + $0x20] sm:$0xff]
    %v1111 = vld [vmem:[#allocation2 + $0x28] sm:$0xff]
    %v1112 = vld [vmem:[#allocation2 + $0x30] sm:$0xff]
    %v1113 = vld [vmem:[#allocation2 + $0x38] sm:$0xff]
    %v1114 = vld [vmem:[#allocation2 + $0x40] sm:$0xff]
    %v1115 = vld [vmem:[#allocation2 + $0x48] sm:$0xff]
    %v1116 = vld [vmem:[#allocation2 + $0x50] sm:$0xff]
    %v1117 = vld [vmem:[#allocation2 + $0x58] sm:$0xff]
    %v1118 = vld [vmem:[#allocation2 + $0x60] sm:$0xff]
    %v1119 = vld [vmem:[#allocation2 + $0x68] sm:$0xff]
    %v1120 = vld [vmem:[#allocation2 + $0x70] sm:$0xff]
    %v1121 = vld [vmem:[#allocation2 + $0x78] sm:$0xff]
    %v1122 = vld [vmem:[#allocation2 + $0x80] sm:$0xff]
    %v1123 = vld [vmem:[#allocation2 + $0x88] sm:$0xff]
    %v1124 = vld [vmem:[#allocation2 + $0x90] sm:$0xff]
    %v1125 = vld [vmem:[#allocation2 + $0x98] sm:$0xff]
    %v1126 = vld [vmem:[#allocation2 + $0xa0] sm:$0xff]
    %v1127 = vld [vmem:[#allocation2 + $0xa8] sm:$0xff]
    %v1128 = vld [vmem:[#allocation2 + $0xb0] sm:$0xff]
    %v1129 = vld [vmem:[#allocation2 + $0xb8] sm:$0xff]
    %v1130 = vld [vmem:[#allocation2 + $0xc0] sm:$0xff]
    %v1131 = vld [vmem:[#allocation2 + $0xc8] sm:$0xff]
    %v1132 = vld [vmem:[#allocation2 + $0xd0] sm:$0xff]
    %v1133 = vld [vmem:[#allocation2 + $0xd8] sm:$0xff]
    %v1134 = vld [vmem:[#allocation2 + $0xe0] sm:$0xff]
    %v1135 = vld [vmem:[#allocation2 + $0xe8] sm:$0xff]
    %v1136 = vld [vmem:[#allocation2 + $0xf0] sm:$0xff]
    %v1137 = vld [vmem:[#allocation2 + $0xf8] sm:$0xff]
    %1138 = vmatprep.subr.bf16.mxu0 0
    %1139 = vmatpush1.bf16.msra.mxu0 %v506
    %1140 = vmatprep.subr.bf16.mxu0 0
    %1141 = vmatpush1.bf16.msra.mxu0 %v507
    %1142 = vmatprep.subr.bf16.mxu0 0
    %1143 = vmatpush1.bf16.msra.mxu0 %v508
    %1144 = vmatprep.subr.bf16.mxu0 0
    %1145 = vmatpush1.bf16.msra.mxu0 %v509
    %1146 = vmatprep.subr.bf16.mxu0 0
    %1147 = vmatpush1.bf16.msra.mxu0 %v510
    %1148 = vmatprep.subr.bf16.mxu0 0
    %1149 = vmatpush1.bf16.msra.mxu0 %v511
    %1150 = vmatprep.subr.bf16.mxu0 0
    %1151 = vmatpush1.bf16.msra.mxu0 %v512
    %1152 = vmatprep.subr.bf16.mxu0 0
    %1153 = vmatpush1.bf16.msra.mxu0 %v513
    %1154 = vmatprep.subr.bf16.mxu0 0
    %1155 = vmatpush1.bf16.msra.mxu0 %v514
    %1156 = vmatprep.subr.bf16.mxu0 0
    %1157 = vmatpush1.bf16.msra.mxu0 %v515
    %1158 = vmatprep.subr.bf16.mxu0 0
    %1159 = vmatpush1.bf16.msra.mxu0 %v516
    %1160 = vmatprep.subr.bf16.mxu0 0
    %1161 = vmatpush1.bf16.msra.mxu0 %v517
    %1162 = vmatprep.subr.bf16.mxu0 0
    %1163 = vmatpush1.bf16.msra.mxu0 %v518
    %1164 = vmatprep.subr.bf16.mxu0 0
    %1165 = vmatpush1.bf16.msra.mxu0 %v519
    %1166 = vmatprep.subr.bf16.mxu0 0
    %1167 = vmatpush1.bf16.msra.mxu0 %v520
    %1168 = vmatprep.subr.bf16.mxu0 0
    %1169 = vmatpush1.bf16.msra.mxu0 %v521
    %1170 = vmatprep.mubr.bf16.mxu0 %v1075
    %1171 = vmatmul.mubr.bf16.gmra.mrb[0].mxu0 %v1074
    %v1172 = vpop.f32.mrb[0].mxu0
    %v1173 = vadd.f32 0.0, %v1172
    %v1174 = vpop.f32.mrb[0].mxu0
    %v1175 = vpop.f32.mrb[0].mxu0
    %v1176 = vadd.f32 0.0, %v1175
    %v1177 = vpop.f32.mrb[0].mxu0
    %1178 = vmatprep.mubr.bf16.mxu0 %v1077
    %1179 = vmatmul.mubr.bf16.gmra.mrb[0].mxu0 %v1076
    %v1180 = vpop.f32.mrb[0].mxu0
    %v1181 = vadd.f32 0.0, %v1180
    %v1182 = vpop.f32.mrb[0].mxu0
    %v1183 = vpop.f32.mrb[0].mxu0
    %v1184 = vadd.f32 0.0, %v1183
    %v1185 = vpop.f32.mrb[0].mxu0
    %1186 = vmatprep.mubr.bf16.mxu0 %v1079
    %1187 = vmatmul.mubr.bf16.gmra.mrb[0].mxu0 %v1078
    %v1188 = vpop.f32.mrb[0].mxu0
    %v1189 = vadd.f32 0.0, %v1188
    %v1190 = vpop.f32.mrb[0].mxu0
    %v1191 = vpop.f32.mrb[0].mxu0
    %v1192 = vadd.f32 0.0, %v1191
    %v1193 = vpop.f32.mrb[0].mxu0
    %1194 = vmatprep.mubr.bf16.mxu0 %v1081
    %1195 = vmatmul.mubr.bf16.gmra.mrb[0].mxu0 %v1080
    %v1196 = vpop.f32.mrb[0].mxu0
    %v1197 = vadd.f32 0.0, %v1196
    %v1198 = vpop.f32.mrb[0].mxu0
    %v1199 = vpop.f32.mrb[0].mxu0
    %v1200 = vadd.f32 0.0, %v1199
    %v1201 = vpop.f32.mrb[0].mxu0
    %1202 = vmatprep.mubr.bf16.mxu0 %v1083
    %1203 = vmatmul.mubr.bf16.gmra.mrb[0].mxu0 %v1082
    %v1204 = vpop.f32.mrb[0].mxu0
    %v1205 = vadd.f32 0.0, %v1204
    %v1206 = vpop.f32.mrb[0].mxu0
    %v1207 = vpop.f32.mrb[0].mxu0
    %v1208 = vadd.f32 0.0, %v1207
    %v1209 = vpop.f32.mrb[0].mxu0
    %1210 = vmatprep.mubr.bf16.mxu0 %v1085
    %1211 = vmatmul.mubr.bf16.gmra.mrb[0].mxu0 %v1084
    %v1212 = vpop.f32.mrb[0].mxu0
    %v1213 = vadd.f32 0.0, %v1212
    %v1214 = vpop.f32.mrb[0].mxu0
    %v1215 = vpop.f32.mrb[0].mxu0
    %v1216 = vadd.f32 0.0, %v1215
    %v1217 = vpop.f32.mrb[0].mxu0
    %1218 = vmatprep.mubr.bf16.mxu0 %v1087
    %1219 = vmatmul.mubr.bf16.gmra.mrb[0].mxu0 %v1086
    %v1220 = vpop.f32.mrb[0].mxu0
    %v1221 = vadd.f32 0.0, %v1220
    %v1222 = vpop.f32.mrb[0].mxu0
    %v1223 = vpop.f32.mrb[0].mxu0
    %v1224 = vadd.f32 0.0, %v1223
    %v1225 = vpop.f32.mrb[0].mxu0
    %1226 = vmatprep.mubr.bf16.mxu0 %v1089
    %1227 = vmatmul.mubr.bf16.gmra.mrb[0].mxu0 %v1088
    %v1228 = vpop.f32.mrb[0].mxu0
    %v1229 = vadd.f32 0.0, %v1228
    %v1230 = vpop.f32.mrb[0].mxu0
    %v1231 = vpop.f32.mrb[0].mxu0
    %v1232 = vadd.f32 0.0, %v1231
    %v1233 = vpop.f32.mrb[0].mxu0
    %1234 = vmatprep.mubr.bf16.mxu0 %v1091
    %1235 = vmatmul.mubr.bf16.gmra.mrb[0].mxu0 %v1090
    %v1236 = vpop.f32.mrb[0].mxu0
    %v1237 = vadd.f32 0.0, %v1236
    %v1238 = vpop.f32.mrb[0].mxu0
    %v1239 = vpop.f32.mrb[0].mxu0
    %v1240 = vadd.f32 0.0, %v1239
    %v1241 = vpop.f32.mrb[0].mxu0
    %1242 = vmatprep.mubr.bf16.mxu0 %v1093
    %1243 = vmatmul.mubr.bf16.gmra.mrb[0].mxu0 %v1092
    %v1244 = vpop.f32.mrb[0].mxu0
    %v1245 = vadd.f32 0.0, %v1244
    %v1246 = vpop.f32.mrb[0].mxu0
    %v1247 = vpop.f32.mrb[0].mxu0
    %v1248 = vadd.f32 0.0, %v1247
    %v1249 = vpop.f32.mrb[0].mxu0
    %1250 = vmatprep.mubr.bf16.mxu0 %v1095
    %1251 = vmatmul.mubr.bf16.gmra.mrb[0].mxu0 %v1094
    %v1252 = vpop.f32.mrb[0].mxu0
    %v1253 = vadd.f32 0.0, %v1252
    %v1254 = vpop.f32.mrb[0].mxu0
    %v1255 = vpop.f32.mrb[0].mxu0
    %v1256 = vadd.f32 0.0, %v1255
    %v1257 = vpop.f32.mrb[0].mxu0
    %1258 = vmatprep.mubr.bf16.mxu0 %v1097
    %1259 = vmatmul.mubr.bf16.gmra.mrb[0].mxu0 %v1096
    %v1260 = vpop.f32.mrb[0].mxu0
    %v1261 = vadd.f32 0.0, %v1260
    %v1262 = vpop.f32.mrb[0].mxu0
    %v1263 = vpop.f32.mrb[0].mxu0
    %v1264 = vadd.f32 0.0, %v1263
    %v1265 = vpop.f32.mrb[0].mxu0
    %1266 = vmatprep.mubr.bf16.mxu0 %v1099
    %1267 = vmatmul.mubr.bf16.gmra.mrb[0].mxu0 %v1098
    %v1268 = vpop.f32.mrb[0].mxu0
    %v1269 = vadd.f32 0.0, %v1268
    %v1270 = vpop.f32.mrb[0].mxu0
    %v1271 = vpop.f32.mrb[0].mxu0
    %v1272 = vadd.f32 0.0, %v1271
    %v1273 = vpop.f32.mrb[0].mxu0
    %1274 = vmatprep.mubr.bf16.mxu0 %v1101
    %1275 = vmatmul.mubr.bf16.gmra.mrb[0].mxu0 %v1100
    %v1276 = vpop.f32.mrb[0].mxu0
    %v1277 = vadd.f32 0.0, %v1276
    %v1278 = vpop.f32.mrb[0].mxu0
    %v1279 = vpop.f32.mrb[0].mxu0
    %v1280 = vadd.f32 0.0, %v1279
    %v1281 = vpop.f32.mrb[0].mxu0
    %1282 = vmatprep.mubr.bf16.mxu0 %v1103
    %1283 = vmatmul.mubr.bf16.gmra.mrb[0].mxu0 %v1102
    %v1284 = vpop.f32.mrb[0].mxu0
    %v1285 = vadd.f32 0.0, %v1284
    %v1286 = vpop.f32.mrb[0].mxu0
    %v1287 = vpop.f32.mrb[0].mxu0
    %v1288 = vadd.f32 0.0, %v1287
    %v1289 = vpop.f32.mrb[0].mxu0
    %1290 = vmatprep.mubr.bf16.mxu0 %v1105
    %1291 = vmatmul.mubr.bf16.gmra.mrb[0].mxu0 %v1104
    %v1292 = vpop.f32.mrb[0].mxu0
    %v1293 = vadd.f32 0.0, %v1292
    %v1294 = vpop.f32.mrb[0].mxu0
    %v1295 = vpop.f32.mrb[0].mxu0
    %v1296 = vadd.f32 0.0, %v1295
    %v1297 = vpop.f32.mrb[0].mxu0
    %1298 = vdwg.mxu0
    %v1299 = vadd.f32 %v1106, %v1173
    %v1300 = vadd.f32 %v1107, %v1176
    %v1301 = vadd.f32 %v1108, %v1181
    %v1302 = vadd.f32 %v1109, %v1184
    %v1303 = vadd.f32 %v1110, %v1189
    %v1304 = vadd.f32 %v1111, %v1192
    %v1305 = vadd.f32 %v1112, %v1197
    %v1306 = vadd.f32 %v1113, %v1200
    %v1307 = vadd.f32 %v1114, %v1205
    %v1308 = vadd.f32 %v1115, %v1208
    %v1309 = vadd.f32 %v1116, %v1213
    %v1310 = vadd.f32 %v1117, %v1216
    %v1311 = vadd.f32 %v1118, %v1221
    %v1312 = vadd.f32 %v1119, %v1224
    %v1313 = vadd.f32 %v1120, %v1229
    %v1314 = vadd.f32 %v1121, %v1232
    %v1315 = vadd.f32 %v1122, %v1237
    %v1316 = vadd.f32 %v1123, %v1240
    %v1317 = vadd.f32 %v1124, %v1245
    %v1318 = vadd.f32 %v1125, %v1248
    %v1319 = vadd.f32 %v1126, %v1253
    %v1320 = vadd.f32 %v1127, %v1256
    %v1321 = vadd.f32 %v1128, %v1261
    %v1322 = vadd.f32 %v1129, %v1264
    %v1323 = vadd.f32 %v1130, %v1269
    %v1324 = vadd.f32 %v1131, %v1272
    %v1325 = vadd.f32 %v1132, %v1277
    %v1326 = vadd.f32 %v1133, %v1280
    %v1327 = vadd.f32 %v1134, %v1285
    %v1328 = vadd.f32 %v1135, %v1288
    %v1329 = vadd.f32 %v1136, %v1293
    %v1330 = vadd.f32 %v1137, %v1296
    %1331 = vst [vmem:[#allocation2] sm:$0xff] %v1299
    %1332 = vst [vmem:[#allocation2 + $0x8] sm:$0xff] %v1300
    %1333 = vst [vmem:[#allocation2 + $0x10] sm:$0xff] %v1301
    %1334 = vst [vmem:[#allocation2 + $0x18] sm:$0xff] %v1302
    %1335 = vst [vmem:[#allocation2 + $0x20] sm:$0xff] %v1303
    %1336 = vst [vmem:[#allocation2 + $0x28] sm:$0xff] %v1304
    %1337 = vst [vmem:[#allocation2 + $0x30] sm:$0xff] %v1305
    %1338 = vst [vmem:[#allocation2 + $0x38] sm:$0xff] %v1306
    %1339 = vst [vmem:[#allocation2 + $0x40] sm:$0xff] %v1307
    %1340 = vst [vmem:[#allocation2 + $0x48] sm:$0xff] %v1308
    %1341 = vst [vmem:[#allocation2 + $0x50] sm:$0xff] %v1309
    %1342 = vst [vmem:[#allocation2 + $0x58] sm:$0xff] %v1310
    %1343 = vst [vmem:[#allocation2 + $0x60] sm:$0xff] %v1311
    %1344 = vst [vmem:[#allocation2 + $0x68] sm:$0xff] %v1312
    %1345 = vst [vmem:[#allocation2 + $0x70] sm:$0xff] %v1313
    %1346 = vst [vmem:[#allocation2 + $0x78] sm:$0xff] %v1314
    %1347 = vst [vmem:[#allocation2 + $0x80] sm:$0xff] %v1315
    %1348 = vst [vmem:[#allocation2 + $0x88] sm:$0xff] %v1316
    %1349 = vst [vmem:[#allocation2 + $0x90] sm:$0xff] %v1317
    %1350 = vst [vmem:[#allocation2 + $0x98] sm:$0xff] %v1318
    %1351 = vst [vmem:[#allocation2 + $0xa0] sm:$0xff] %v1319
    %1352 = vst [vmem:[#allocation2 + $0xa8] sm:$0xff] %v1320
    %1353 = vst [vmem:[#allocation2 + $0xb0] sm:$0xff] %v1321
    %1354 = vst [vmem:[#allocation2 + $0xb8] sm:$0xff] %v1322
    %1355 = vst [vmem:[#allocation2 + $0xc0] sm:$0xff] %v1323
    %1356 = vst [vmem:[#allocation2 + $0xc8] sm:$0xff] %v1324
    %1357 = vst [vmem:[#allocation2 + $0xd0] sm:$0xff] %v1325
    %1358 = vst [vmem:[#allocation2 + $0xd8] sm:$0xff] %v1326
    %1359 = vst [vmem:[#allocation2 + $0xe0] sm:$0xff] %v1327
    %1360 = vst [vmem:[#allocation2 + $0xe8] sm:$0xff] %v1328
    %1361 = vst [vmem:[#allocation2 + $0xf0] sm:$0xff] %v1329
    %1362 = vst [vmem:[#allocation2 + $0xf8] sm:$0xff] %v1330
    // Predicated region
    $region22: #{tpu_custom_call.1} parent=1 // pred_check
      %p1363 = pneg %p19
    $region23: #{tpu_custom_call.1} parent=1 // pred_check_branch
      %1365 = sbr.rel (%p1363) target = $region25
    $region24: #{tpu_custom_call.1} parent=1 // pred_region
      %v1366 = vld [vmem:[#allocation3] sm:$0xff]
      %v1367 = vld [vmem:[#allocation3 + $0x8] sm:$0xff]
      %v1368 = vld [vmem:[#allocation3 + $0x10] sm:$0xff]
      %v1369 = vld [vmem:[#allocation3 + $0x18] sm:$0xff]
      %v1370 = vld [vmem:[#allocation3 + $0x20] sm:$0xff]
      %v1371 = vld [vmem:[#allocation3 + $0x28] sm:$0xff]
      %v1372 = vld [vmem:[#allocation3 + $0x30] sm:$0xff]
      %v1373 = vld [vmem:[#allocation3 + $0x38] sm:$0xff]
      %v1374 = vld [vmem:[#allocation3 + $0x40] sm:$0xff]
      %v1375 = vld [vmem:[#allocation3 + $0x48] sm:$0xff]
      %v1376 = vld [vmem:[#allocation3 + $0x50] sm:$0xff]
      %v1377 = vld [vmem:[#allocation3 + $0x58] sm:$0xff]
      %v1378 = vld [vmem:[#allocation3 + $0x60] sm:$0xff]
      %v1379 = vld [vmem:[#allocation3 + $0x68] sm:$0xff]
      %v1380 = vld [vmem:[#allocation3 + $0x70] sm:$0xff]
      %v1381 = vld [vmem:[#allocation3 + $0x78] sm:$0xff]
      %v1382 = vld [vmem:[#allocation3 + $0x80] sm:$0xff]
      %v1383 = vld [vmem:[#allocation3 + $0x88] sm:$0xff]
      %v1384 = vld [vmem:[#allocation3 + $0x90] sm:$0xff]
      %v1385 = vld [vmem:[#allocation3 + $0x98] sm:$0xff]
      %v1386 = vld [vmem:[#allocation3 + $0xa0] sm:$0xff]
      %v1387 = vld [vmem:[#allocation3 + $0xa8] sm:$0xff]
      %v1388 = vld [vmem:[#allocation3 + $0xb0] sm:$0xff]
      %v1389 = vld [vmem:[#allocation3 + $0xb8] sm:$0xff]
      %v1390 = vld [vmem:[#allocation3 + $0xc0] sm:$0xff]
      %v1391 = vld [vmem:[#allocation3 + $0xc8] sm:$0xff]
      %v1392 = vld [vmem:[#allocation3 + $0xd0] sm:$0xff]
      %v1393 = vld [vmem:[#allocation3 + $0xd8] sm:$0xff]
      %v1394 = vld [vmem:[#allocation3 + $0xe0] sm:$0xff]
      %v1395 = vld [vmem:[#allocation3 + $0xe8] sm:$0xff]
      %v1396 = vld [vmem:[#allocation3 + $0xf0] sm:$0xff]
      %v1397 = vld [vmem:[#allocation3 + $0xf8] sm:$0xff]
      %v1398 = vmul.f32 %v1366, 1.442695
      %v1399 = vpow.pop %v1398
      %v1400 = vmul.f32 %v1367, 1.442695
      %v1401 = vpow.pop %v1400
      %v1402 = vmul.f32 %v1368, 1.442695
      %v1403 = vpow.pop %v1402
      %v1404 = vmul.f32 %v1369, 1.442695
      %v1405 = vpow.pop %v1404
      %v1406 = vmul.f32 %v1370, 1.442695
      %v1407 = vpow.pop %v1406
      %v1408 = vmul.f32 %v1371, 1.442695
      %v1409 = vpow.pop %v1408
      %v1410 = vmul.f32 %v1372, 1.442695
      %v1411 = vpow.pop %v1410
      %v1412 = vmul.f32 %v1373, 1.442695
      %v1413 = vpow.pop %v1412
      %v1414 = vmul.f32 %v1374, 1.442695
      %v1415 = vpow.pop %v1414
      %v1416 = vmul.f32 %v1375, 1.442695
      %v1417 = vpow.pop %v1416
      %v1418 = vmul.f32 %v1376, 1.442695
      %v1419 = vpow.pop %v1418
      %v1420 = vmul.f32 %v1377, 1.442695
      %v1421 = vpow.pop %v1420
      %v1422 = vmul.f32 %v1378, 1.442695
      %v1423 = vpow.pop %v1422
      %v1424 = vmul.f32 %v1379, 1.442695
      %v1425 = vpow.pop %v1424
      %v1426 = vmul.f32 %v1380, 1.442695
      %v1427 = vpow.pop %v1426
      %v1428 = vmul.f32 %v1381, 1.442695
      %v1429 = vpow.pop %v1428
      %v1430 = vmul.f32 %v1382, 1.442695
      %v1431 = vpow.pop %v1430
      %v1432 = vmul.f32 %v1383, 1.442695
      %v1433 = vpow.pop %v1432
      %v1434 = vmul.f32 %v1384, 1.442695
      %v1435 = vpow.pop %v1434
      %v1436 = vmul.f32 %v1385, 1.442695
      %v1437 = vpow.pop %v1436
      %v1438 = vmul.f32 %v1386, 1.442695
      %v1439 = vpow.pop %v1438
      %v1440 = vmul.f32 %v1387, 1.442695
      %v1441 = vpow.pop %v1440
      %v1442 = vmul.f32 %v1388, 1.442695
      %v1443 = vpow.pop %v1442
      %v1444 = vmul.f32 %v1389, 1.442695
      %v1445 = vpow.pop %v1444
      %v1446 = vmul.f32 %v1390, 1.442695
      %v1447 = vpow.pop %v1446
      %v1448 = vmul.f32 %v1391, 1.442695
      %v1449 = vpow.pop %v1448
      %v1450 = vmul.f32 %v1392, 1.442695
      %v1451 = vpow.pop %v1450
      %v1452 = vmul.f32 %v1393, 1.442695
      %v1453 = vpow.pop %v1452
      %v1454 = vmul.f32 %v1394, 1.442695
      %v1455 = vpow.pop %v1454
      %v1456 = vmul.f32 %v1395, 1.442695
      %v1457 = vpow.pop %v1456
      %v1458 = vmul.f32 %v1396, 1.442695
      %v1459 = vpow.pop %v1458
      %v1460 = vmul.f32 %v1397, 1.442695
      %v1461 = vpow.pop %v1460
      %v1462 = vld [vmem:[#allocation2] sm:$0xff]
      %v1463 = vld [vmem:[#allocation2 + $0x8] sm:$0xff]
      %v1464 = vld [vmem:[#allocation2 + $0x10] sm:$0xff]
      %v1465 = vld [vmem:[#allocation2 + $0x18] sm:$0xff]
      %v1466 = vld [vmem:[#allocation2 + $0x20] sm:$0xff]
      %v1467 = vld [vmem:[#allocation2 + $0x28] sm:$0xff]
      %v1468 = vld [vmem:[#allocation2 + $0x30] sm:$0xff]
      %v1469 = vld [vmem:[#allocation2 + $0x38] sm:$0xff]
      %v1470 = vld [vmem:[#allocation2 + $0x40] sm:$0xff]
      %v1471 = vld [vmem:[#allocation2 + $0x48] sm:$0xff]
      %v1472 = vld [vmem:[#allocation2 + $0x50] sm:$0xff]
      %v1473 = vld [vmem:[#allocation2 + $0x58] sm:$0xff]
      %v1474 = vld [vmem:[#allocation2 + $0x60] sm:$0xff]
      %v1475 = vld [vmem:[#allocation2 + $0x68] sm:$0xff]
      %v1476 = vld [vmem:[#allocation2 + $0x70] sm:$0xff]
      %v1477 = vld [vmem:[#allocation2 + $0x78] sm:$0xff]
      %v1478 = vld [vmem:[#allocation2 + $0x80] sm:$0xff]
      %v1479 = vld [vmem:[#allocation2 + $0x88] sm:$0xff]
      %v1480 = vld [vmem:[#allocation2 + $0x90] sm:$0xff]
      %v1481 = vld [vmem:[#allocation2 + $0x98] sm:$0xff]
      %v1482 = vld [vmem:[#allocation2 + $0xa0] sm:$0xff]
      %v1483 = vld [vmem:[#allocation2 + $0xa8] sm:$0xff]
      %v1484 = vld [vmem:[#allocation2 + $0xb0] sm:$0xff]
      %v1485 = vld [vmem:[#allocation2 + $0xb8] sm:$0xff]
      %v1486 = vld [vmem:[#allocation2 + $0xc0] sm:$0xff]
      %v1487 = vld [vmem:[#allocation2 + $0xc8] sm:$0xff]
      %v1488 = vld [vmem:[#allocation2 + $0xd0] sm:$0xff]
      %v1489 = vld [vmem:[#allocation2 + $0xd8] sm:$0xff]
      %v1490 = vld [vmem:[#allocation2 + $0xe0] sm:$0xff]
      %v1491 = vld [vmem:[#allocation2 + $0xe8] sm:$0xff]
      %v1492 = vld [vmem:[#allocation2 + $0xf0] sm:$0xff]
      %v1493 = vld [vmem:[#allocation2 + $0xf8] sm:$0xff]
      %v1494 = vadd.f32 %v1399, %v1462
      %v1495 = vadd.f32 %v1401, %v1463
      %v1496 = vadd.f32 %v1403, %v1464
      %v1497 = vadd.f32 %v1405, %v1465
      %v1498 = vadd.f32 %v1407, %v1466
      %v1499 = vadd.f32 %v1409, %v1467
      %v1500 = vadd.f32 %v1411, %v1468
      %v1501 = vadd.f32 %v1413, %v1469
      %v1502 = vadd.f32 %v1415, %v1470
      %v1503 = vadd.f32 %v1417, %v1471
      %v1504 = vadd.f32 %v1419, %v1472
      %v1505 = vadd.f32 %v1421, %v1473
      %v1506 = vadd.f32 %v1423, %v1474
      %v1507 = vadd.f32 %v1425, %v1475
      %v1508 = vadd.f32 %v1427, %v1476
      %v1509 = vadd.f32 %v1429, %v1477
      %v1510 = vadd.f32 %v1431, %v1478
      %v1511 = vadd.f32 %v1433, %v1479
      %v1512 = vadd.f32 %v1435, %v1480
      %v1513 = vadd.f32 %v1437, %v1481
      %v1514 = vadd.f32 %v1439, %v1482
      %v1515 = vadd.f32 %v1441, %v1483
      %v1516 = vadd.f32 %v1443, %v1484
      %v1517 = vadd.f32 %v1445, %v1485
      %v1518 = vadd.f32 %v1447, %v1486
      %v1519 = vadd.f32 %v1449, %v1487
      %v1520 = vadd.f32 %v1451, %v1488
      %v1521 = vadd.f32 %v1453, %v1489
      %v1522 = vadd.f32 %v1455, %v1490
      %v1523 = vadd.f32 %v1457, %v1491
      %v1524 = vadd.f32 %v1459, %v1492
      %v1525 = vadd.f32 %v1461, %v1493
      %v1526 = vlog2.pop %v1494
      %v1527 = vmul.f32 %v1526, 0.6931472
      %v1528 = vlog2.pop %v1495
      %v1529 = vmul.f32 %v1528, 0.6931472
      %v1530 = vlog2.pop %v1496
      %v1531 = vmul.f32 %v1530, 0.6931472
      %v1532 = vlog2.pop %v1497
      %v1533 = vmul.f32 %v1532, 0.6931472
      %v1534 = vlog2.pop %v1498
      %v1535 = vmul.f32 %v1534, 0.6931472
      %v1536 = vlog2.pop %v1499
      %v1537 = vmul.f32 %v1536, 0.6931472
      %v1538 = vlog2.pop %v1500
      %v1539 = vmul.f32 %v1538, 0.6931472
      %v1540 = vlog2.pop %v1501
      %v1541 = vmul.f32 %v1540, 0.6931472
      %v1542 = vlog2.pop %v1502
      %v1543 = vmul.f32 %v1542, 0.6931472
      %v1544 = vlog2.pop %v1503
      %v1545 = vmul.f32 %v1544, 0.6931472
      %v1546 = vlog2.pop %v1504
      %v1547 = vmul.f32 %v1546, 0.6931472
      %v1548 = vlog2.pop %v1505
      %v1549 = vmul.f32 %v1548, 0.6931472
      %v1550 = vlog2.pop %v1506
      %v1551 = vmul.f32 %v1550, 0.6931472
      %v1552 = vlog2.pop %v1507
      %v1553 = vmul.f32 %v1552, 0.6931472
      %v1554 = vlog2.pop %v1508
      %v1555 = vmul.f32 %v1554, 0.6931472
      %v1556 = vlog2.pop %v1509
      %v1557 = vmul.f32 %v1556, 0.6931472
      %v1558 = vlog2.pop %v1510
      %v1559 = vmul.f32 %v1558, 0.6931472
      %v1560 = vlog2.pop %v1511
      %v1561 = vmul.f32 %v1560, 0.6931472
      %v1562 = vlog2.pop %v1512
      %v1563 = vmul.f32 %v1562, 0.6931472
      %v1564 = vlog2.pop %v1513
      %v1565 = vmul.f32 %v1564, 0.6931472
      %v1566 = vlog2.pop %v1514
      %v1567 = vmul.f32 %v1566, 0.6931472
      %v1568 = vlog2.pop %v1515
      %v1569 = vmul.f32 %v1568, 0.6931472
      %v1570 = vlog2.pop %v1516
      %v1571 = vmul.f32 %v1570, 0.6931472
      %v1572 = vlog2.pop %v1517
      %v1573 = vmul.f32 %v1572, 0.6931472
      %v1574 = vlog2.pop %v1518
      %v1575 = vmul.f32 %v1574, 0.6931472
      %v1576 = vlog2.pop %v1519
      %v1577 = vmul.f32 %v1576, 0.6931472
      %v1578 = vlog2.pop %v1520
      %v1579 = vmul.f32 %v1578, 0.6931472
      %v1580 = vlog2.pop %v1521
      %v1581 = vmul.f32 %v1580, 0.6931472
      %v1582 = vlog2.pop %v1522
      %v1583 = vmul.f32 %v1582, 0.6931472
      %v1584 = vlog2.pop %v1523
      %v1585 = vmul.f32 %v1584, 0.6931472
      %v1586 = vlog2.pop %v1524
      %v1587 = vmul.f32 %v1586, 0.6931472
      %v1588 = vlog2.pop %v1525
      %v1589 = vmul.f32 %v1588, 0.6931472
      %v1590 = vsub.f32 %v1527, %v1366
      %v1591 = vsub.f32 %v1529, %v1367
      %v1592 = vsub.f32 %v1531, %v1368
      %v1593 = vsub.f32 %v1533, %v1369
      %v1594 = vsub.f32 %v1535, %v1370
      %v1595 = vsub.f32 %v1537, %v1371
      %v1596 = vsub.f32 %v1539, %v1372
      %v1597 = vsub.f32 %v1541, %v1373
      %v1598 = vsub.f32 %v1543, %v1374
      %v1599 = vsub.f32 %v1545, %v1375
      %v1600 = vsub.f32 %v1547, %v1376
      %v1601 = vsub.f32 %v1549, %v1377
      %v1602 = vsub.f32 %v1551, %v1378
      %v1603 = vsub.f32 %v1553, %v1379
      %v1604 = vsub.f32 %v1555, %v1380
      %v1605 = vsub.f32 %v1557, %v1381
      %v1606 = vsub.f32 %v1559, %v1382
      %v1607 = vsub.f32 %v1561, %v1383
      %v1608 = vsub.f32 %v1563, %v1384
      %v1609 = vsub.f32 %v1565, %v1385
      %v1610 = vsub.f32 %v1567, %v1386
      %v1611 = vsub.f32 %v1569, %v1387
      %v1612 = vsub.f32 %v1571, %v1388
      %v1613 = vsub.f32 %v1573, %v1389
      %v1614 = vsub.f32 %v1575, %v1390
      %v1615 = vsub.f32 %v1577, %v1391
      %v1616 = vsub.f32 %v1579, %v1392
      %v1617 = vsub.f32 %v1581, %v1393
      %v1618 = vsub.f32 %v1583, %v1394
      %v1619 = vsub.f32 %v1585, %v1395
      %v1620 = vsub.f32 %v1587, %v1396
      %v1621 = vsub.f32 %v1589, %v1397
      %v1622 = vlaneseq
      %v1623 = vshrl.u32 %v1622, 7
      %v1624 = vadd.s32 %v1623, 8
      %v1625 = vadd.s32 %v1623, 16
      %v1626 = vadd.s32 %v1623, 24
      %v1627 = vadd.s32 %v1623, 32
      %v1628 = vadd.s32 %v1623, 40
      %v1629 = vadd.s32 %v1623, 48
      %v1630 = vadd.s32 %v1623, 56
      %v1631 = vadd.s32 %v1623, 64
      %v1632 = vadd.s32 %v1623, 72
      %v1633 = vadd.s32 %v1623, 80
      %v1634 = vadd.s32 %v1623, 88
      %v1635 = vadd.s32 %v1623, 96
      %v1636 = vadd.s32 %v1623, 104
      %v1637 = vadd.s32 %v1623, 112
      %v1638 = vadd.s32 %v1623, 120
      %v1639 = vadd.s32 %v1623, 128
      %v1640 = vadd.s32 %v1623, 136
      %v1641 = vadd.s32 %v1623, 144
      %v1642 = vadd.s32 %v1623, 152
      %v1643 = vadd.s32 %v1623, 160
      %v1644 = vadd.s32 %v1623, 168
      %v1645 = vadd.s32 %v1623, 176
      %v1646 = vadd.s32 %v1623, 184
      %v1647 = vadd.s32 %v1623, 192
      %v1648 = vadd.s32 %v1623, 200
      %v1649 = vadd.s32 %v1623, 208
      %v1650 = vadd.s32 %v1623, 216
      %v1651 = vadd.s32 %v1623, 224
      %v1652 = vadd.s32 %v1623, 232
      %v1653 = vadd.s32 %v1623, 240
      %v1654 = vadd.s32 %v1623, 248
      %v1655 = vld [vmem:[%s3] sm:$0x1]
      %vm1656 = vcmp.ge.s32.totalorder %v1655, 0
      %v1657 = vlaneseq
      %v1658 = vshrl.u32 %v1657, 7
      %v1659 = vsub.s32 0, %v1658
      %v1660 = vrot.slane %v1655, %v1659
      %vm1661 = vcmp.eq.s32.totalorder %v1623, %v1660
      %vm1662 = vcmp.eq.s32.totalorder %v1624, %v1660
      %vm1663 = vcmp.eq.s32.totalorder %v1625, %v1660
      %vm1664 = vcmp.eq.s32.totalorder %v1626, %v1660
      %vm1665 = vcmp.eq.s32.totalorder %v1627, %v1660
      %vm1666 = vcmp.eq.s32.totalorder %v1628, %v1660
      %vm1667 = vcmp.eq.s32.totalorder %v1629, %v1660
      %vm1668 = vcmp.eq.s32.totalorder %v1630, %v1660
      %vm1669 = vcmp.eq.s32.totalorder %v1631, %v1660
      %vm1670 = vcmp.eq.s32.totalorder %v1632, %v1660
      %vm1671 = vcmp.eq.s32.totalorder %v1633, %v1660
      %vm1672 = vcmp.eq.s32.totalorder %v1634, %v1660
      %vm1673 = vcmp.eq.s32.totalorder %v1635, %v1660
      %vm1674 = vcmp.eq.s32.totalorder %v1636, %v1660
      %vm1675 = vcmp.eq.s32.totalorder %v1637, %v1660
      %vm1676 = vcmp.eq.s32.totalorder %v1638, %v1660
      %vm1677 = vcmp.eq.s32.totalorder %v1639, %v1660
      %vm1678 = vcmp.eq.s32.totalorder %v1640, %v1660
      %vm1679 = vcmp.eq.s32.totalorder %v1641, %v1660
      %vm1680 = vcmp.eq.s32.totalorder %v1642, %v1660
      %vm1681 = vcmp.eq.s32.totalorder %v1643, %v1660
      %vm1682 = vcmp.eq.s32.totalorder %v1644, %v1660
      %vm1683 = vcmp.eq.s32.totalorder %v1645, %v1660
      %vm1684 = vcmp.eq.s32.totalorder %v1646, %v1660
      %vm1685 = vcmp.eq.s32.totalorder %v1647, %v1660
      %vm1686 = vcmp.eq.s32.totalorder %v1648, %v1660
      %vm1687 = vcmp.eq.s32.totalorder %v1649, %v1660
      %vm1688 = vcmp.eq.s32.totalorder %v1650, %v1660
      %vm1689 = vcmp.eq.s32.totalorder %v1651, %v1660
      %vm1690 = vcmp.eq.s32.totalorder %v1652, %v1660
      %vm1691 = vcmp.eq.s32.totalorder %v1653, %v1660
      %vm1692 = vcmp.eq.s32.totalorder %v1654, %v1660
      %v1693 = vsel %vm1661, 0.0, %v1590
      %v1694 = vsel %vm1662, 0.0, %v1591
      %v1695 = vsel %vm1663, 0.0, %v1592
      %v1696 = vsel %vm1664, 0.0, %v1593
      %v1697 = vsel %vm1665, 0.0, %v1594
      %v1698 = vsel %vm1666, 0.0, %v1595
      %v1699 = vsel %vm1667, 0.0, %v1596
      %v1700 = vsel %vm1668, 0.0, %v1597
      %v1701 = vsel %vm1669, 0.0, %v1598
      %v1702 = vsel %vm1670, 0.0, %v1599
      %v1703 = vsel %vm1671, 0.0, %v1600
      %v1704 = vsel %vm1672, 0.0, %v1601
      %v1705 = vsel %vm1673, 0.0, %v1602
      %v1706 = vsel %vm1674, 0.0, %v1603
      %v1707 = vsel %vm1675, 0.0, %v1604
      %v1708 = vsel %vm1676, 0.0, %v1605
      %v1709 = vsel %vm1677, 0.0, %v1606
      %v1710 = vsel %vm1678, 0.0, %v1607
      %v1711 = vsel %vm1679, 0.0, %v1608
      %v1712 = vsel %vm1680, 0.0, %v1609
      %v1713 = vsel %vm1681, 0.0, %v1610
      %v1714 = vsel %vm1682, 0.0, %v1611
      %v1715 = vsel %vm1683, 0.0, %v1612
      %v1716 = vsel %vm1684, 0.0, %v1613
      %v1717 = vsel %vm1685, 0.0, %v1614
      %v1718 = vsel %vm1686, 0.0, %v1615
      %v1719 = vsel %vm1687, 0.0, %v1616
      %v1720 = vsel %vm1688, 0.0, %v1617
      %v1721 = vsel %vm1689, 0.0, %v1618
      %v1722 = vsel %vm1690, 0.0, %v1619
      %v1723 = vsel %vm1691, 0.0, %v1620
      %v1724 = vsel %vm1692, 0.0, %v1621
      %v1725 = vsel %vm1656, 1, 0
      %v1726 = vlaneseq
      %v1727 = vshrl.u32 %v1726, 7
      %v1728 = vsub.s32 0, %v1727
      %v1729 = vrot.slane %v1725, %v1728
      %vm1730 = vcmp.eq.s32.totalorder %v1729, 1
      %vm1731 = vmand %vm1661, %vm1730
      %vm1732 = vmand %vm1662, %vm1730
      %vm1733 = vmand %vm1663, %vm1730
      %vm1734 = vmand %vm1664, %vm1730
      %vm1735 = vmand %vm1665, %vm1730
      %vm1736 = vmand %vm1666, %vm1730
      %vm1737 = vmand %vm1667, %vm1730
      %vm1738 = vmand %vm1668, %vm1730
      %vm1739 = vmand %vm1669, %vm1730
      %vm1740 = vmand %vm1670, %vm1730
      %vm1741 = vmand %vm1671, %vm1730
      %vm1742 = vmand %vm1672, %vm1730
      %vm1743 = vmand %vm1673, %vm1730
      %vm1744 = vmand %vm1674, %vm1730
      %vm1745 = vmand %vm1675, %vm1730
      %vm1746 = vmand %vm1676, %vm1730
      %vm1747 = vmand %vm1677, %vm1730
      %vm1748 = vmand %vm1678, %vm1730
      %vm1749 = vmand %vm1679, %vm1730
      %vm1750 = vmand %vm1680, %vm1730
      %vm1751 = vmand %vm1681, %vm1730
      %vm1752 = vmand %vm1682, %vm1730
      %vm1753 = vmand %vm1683, %vm1730
      %vm1754 = vmand %vm1684, %vm1730
      %vm1755 = vmand %vm1685, %vm1730
      %vm1756 = vmand %vm1686, %vm1730
      %vm1757 = vmand %vm1687, %vm1730
      %vm1758 = vmand %vm1688, %vm1730
      %vm1759 = vmand %vm1689, %vm1730
      %vm1760 = vmand %vm1690, %vm1730
      %vm1761 = vmand %vm1691, %vm1730
      %vm1762 = vmand %vm1692, %vm1730
      %v1763 = vsel %vm1731, 1.0, 0.0
      %v1764 = vsel %vm1732, 1.0, 0.0
      %v1765 = vsel %vm1733, 1.0, 0.0
      %v1766 = vsel %vm1734, 1.0, 0.0
      %v1767 = vsel %vm1735, 1.0, 0.0
      %v1768 = vsel %vm1736, 1.0, 0.0
      %v1769 = vsel %vm1737, 1.0, 0.0
      %v1770 = vsel %vm1738, 1.0, 0.0
      %v1771 = vsel %vm1739, 1.0, 0.0
      %v1772 = vsel %vm1740, 1.0, 0.0
      %v1773 = vsel %vm1741, 1.0, 0.0
      %v1774 = vsel %vm1742, 1.0, 0.0
      %v1775 = vsel %vm1743, 1.0, 0.0
      %v1776 = vsel %vm1744, 1.0, 0.0
      %v1777 = vsel %vm1745, 1.0, 0.0
      %v1778 = vsel %vm1746, 1.0, 0.0
      %v1779 = vsel %vm1747, 1.0, 0.0
      %v1780 = vsel %vm1748, 1.0, 0.0
      %v1781 = vsel %vm1749, 1.0, 0.0
      %v1782 = vsel %vm1750, 1.0, 0.0
      %v1783 = vsel %vm1751, 1.0, 0.0
      %v1784 = vsel %vm1752, 1.0, 0.0
      %v1785 = vsel %vm1753, 1.0, 0.0
      %v1786 = vsel %vm1754, 1.0, 0.0
      %v1787 = vsel %vm1755, 1.0, 0.0
      %v1788 = vsel %vm1756, 1.0, 0.0
      %v1789 = vsel %vm1757, 1.0, 0.0
      %v1790 = vsel %vm1758, 1.0, 0.0
      %v1791 = vsel %vm1759, 1.0, 0.0
      %v1792 = vsel %vm1760, 1.0, 0.0
      %v1793 = vsel %vm1761, 1.0, 0.0
      %v1794 = vsel %vm1762, 1.0, 0.0
      %1795 = vadd.xlane.f32.xlu0 %v1763
      %v1796 = vpop.xlane.xlu0 %1795
      %1797 = vadd.xlane.f32.xlu0 %v1764
      %v1798 = vpop.xlane.xlu0 %1797
      %1799 = vadd.xlane.f32.xlu0 %v1765
      %v1800 = vpop.xlane.xlu0 %1799
      %1801 = vadd.xlane.f32.xlu0 %v1766
      %v1802 = vpop.xlane.xlu0 %1801
      %1803 = vadd.xlane.f32.xlu0 %v1767
      %v1804 = vpop.xlane.xlu0 %1803
      %1805 = vadd.xlane.f32.xlu0 %v1768
      %v1806 = vpop.xlane.xlu0 %1805
      %1807 = vadd.xlane.f32.xlu0 %v1769
      %v1808 = vpop.xlane.xlu0 %1807
      %1809 = vadd.xlane.f32.xlu0 %v1770
      %v1810 = vpop.xlane.xlu0 %1809
      %1811 = vadd.xlane.f32.xlu0 %v1771
      %v1812 = vpop.xlane.xlu0 %1811
      %1813 = vadd.xlane.f32.xlu0 %v1772
      %v1814 = vpop.xlane.xlu0 %1813
      %1815 = vadd.xlane.f32.xlu0 %v1773
      %v1816 = vpop.xlane.xlu0 %1815
      %1817 = vadd.xlane.f32.xlu0 %v1774
      %v1818 = vpop.xlane.xlu0 %1817
      %1819 = vadd.xlane.f32.xlu0 %v1775
      %v1820 = vpop.xlane.xlu0 %1819
      %1821 = vadd.xlane.f32.xlu0 %v1776
      %v1822 = vpop.xlane.xlu0 %1821
      %1823 = vadd.xlane.f32.xlu0 %v1777
      %v1824 = vpop.xlane.xlu0 %1823
      %1825 = vadd.xlane.f32.xlu0 %v1778
      %v1826 = vpop.xlane.xlu0 %1825
      %1827 = vadd.xlane.f32.xlu0 %v1779
      %v1828 = vpop.xlane.xlu0 %1827
      %1829 = vadd.xlane.f32.xlu0 %v1780
      %v1830 = vpop.xlane.xlu0 %1829
      %1831 = vadd.xlane.f32.xlu0 %v1781
      %v1832 = vpop.xlane.xlu0 %1831
      %1833 = vadd.xlane.f32.xlu0 %v1782
      %v1834 = vpop.xlane.xlu0 %1833
      %1835 = vadd.xlane.f32.xlu0 %v1783
      %v1836 = vpop.xlane.xlu0 %1835
      %1837 = vadd.xlane.f32.xlu0 %v1784
      %v1838 = vpop.xlane.xlu0 %1837
      %1839 = vadd.xlane.f32.xlu0 %v1785
      %v1840 = vpop.xlane.xlu0 %1839
      %1841 = vadd.xlane.f32.xlu0 %v1786
      %v1842 = vpop.xlane.xlu0 %1841
      %1843 = vadd.xlane.f32.xlu0 %v1787
      %v1844 = vpop.xlane.xlu0 %1843
      %1845 = vadd.xlane.f32.xlu0 %v1788
      %v1846 = vpop.xlane.xlu0 %1845
      %1847 = vadd.xlane.f32.xlu0 %v1789
      %v1848 = vpop.xlane.xlu0 %1847
      %1849 = vadd.xlane.f32.xlu0 %v1790
      %v1850 = vpop.xlane.xlu0 %1849
      %1851 = vadd.xlane.f32.xlu0 %v1791
      %v1852 = vpop.xlane.xlu0 %1851
      %1853 = vadd.xlane.f32.xlu0 %v1792
      %v1854 = vpop.xlane.xlu0 %1853
      %1855 = vadd.xlane.f32.xlu0 %v1793
      %v1856 = vpop.xlane.xlu0 %1855
      %1857 = vadd.xlane.f32.xlu0 %v1794
      %v1858 = vpop.xlane.xlu0 %1857
      %vm1859 = vcmp.lt.s32.totalorder %v1623, 6
      %vm1860 = vcmp.lt.s32.totalorder %v1624, 6
      %vm1861 = vcmp.lt.s32.totalorder %v1625, 6
      %vm1862 = vcmp.lt.s32.totalorder %v1626, 6
      %vm1863 = vcmp.lt.s32.totalorder %v1627, 6
      %vm1864 = vcmp.lt.s32.totalorder %v1628, 6
      %vm1865 = vcmp.lt.s32.totalorder %v1629, 6
      %vm1866 = vcmp.lt.s32.totalorder %v1630, 6
      %vm1867 = vcmp.lt.s32.totalorder %v1631, 6
      %vm1868 = vcmp.lt.s32.totalorder %v1632, 6
      %vm1869 = vcmp.lt.s32.totalorder %v1633, 6
      %vm1870 = vcmp.lt.s32.totalorder %v1634, 6
      %vm1871 = vcmp.lt.s32.totalorder %v1635, 6
      %vm1872 = vcmp.lt.s32.totalorder %v1636, 6
      %vm1873 = vcmp.lt.s32.totalorder %v1637, 6
      %vm1874 = vcmp.lt.s32.totalorder %v1638, 6
      %vm1875 = vcmp.lt.s32.totalorder %v1639, 6
      %vm1876 = vcmp.lt.s32.totalorder %v1640, 6
      %vm1877 = vcmp.lt.s32.totalorder %v1641, 6
      %vm1878 = vcmp.lt.s32.totalorder %v1642, 6
      %vm1879 = vcmp.lt.s32.totalorder %v1643, 6
      %vm1880 = vcmp.lt.s32.totalorder %v1644, 6
      %vm1881 = vcmp.lt.s32.totalorder %v1645, 6
      %vm1882 = vcmp.lt.s32.totalorder %v1646, 6
      %vm1883 = vcmp.lt.s32.totalorder %v1647, 6
      %vm1884 = vcmp.lt.s32.totalorder %v1648, 6
      %vm1885 = vcmp.lt.s32.totalorder %v1649, 6
      %vm1886 = vcmp.lt.s32.totalorder %v1650, 6
      %vm1887 = vcmp.lt.s32.totalorder %v1651, 6
      %vm1888 = vcmp.lt.s32.totalorder %v1652, 6
      %vm1889 = vcmp.lt.s32.totalorder %v1653, 6
      %vm1890 = vcmp.lt.s32.totalorder %v1654, 6
      %v1891 = vsel %vm1859, 1, 0
      %v1892 = vsel %vm1860, 1, 0
      %v1893 = vsel %vm1861, 1, 0
      %v1894 = vsel %vm1862, 1, 0
      %v1895 = vsel %vm1863, 1, 0
      %v1896 = vsel %vm1864, 1, 0
      %v1897 = vsel %vm1865, 1, 0
      %v1898 = vsel %vm1866, 1, 0
      %v1899 = vsel %vm1867, 1, 0
      %v1900 = vsel %vm1868, 1, 0
      %v1901 = vsel %vm1869, 1, 0
      %v1902 = vsel %vm1870, 1, 0
      %v1903 = vsel %vm1871, 1, 0
      %v1904 = vsel %vm1872, 1, 0
      %v1905 = vsel %vm1873, 1, 0
      %v1906 = vsel %vm1874, 1, 0
      %v1907 = vsel %vm1875, 1, 0
      %v1908 = vsel %vm1876, 1, 0
      %v1909 = vsel %vm1877, 1, 0
      %v1910 = vsel %vm1878, 1, 0
      %v1911 = vsel %vm1879, 1, 0
      %v1912 = vsel %vm1880, 1, 0
      %v1913 = vsel %vm1881, 1, 0
      %v1914 = vsel %vm1882, 1, 0
      %v1915 = vsel %vm1883, 1, 0
      %v1916 = vsel %vm1884, 1, 0
      %v1917 = vsel %vm1885, 1, 0
      %v1918 = vsel %vm1886, 1, 0
      %v1919 = vsel %vm1887, 1, 0
      %v1920 = vsel %vm1888, 1, 0
      %v1921 = vsel %vm1889, 1, 0
      %v1922 = vsel %vm1890, 1, 0
      %v1923 = vcvt.s32.f32 %v1891
      %v1924 = vcvt.s32.f32 %v1892
      %v1925 = vcvt.s32.f32 %v1893
      %v1926 = vcvt.s32.f32 %v1894
      %v1927 = vcvt.s32.f32 %v1895
      %v1928 = vcvt.s32.f32 %v1896
      %v1929 = vcvt.s32.f32 %v1897
      %v1930 = vcvt.s32.f32 %v1898
      %v1931 = vcvt.s32.f32 %v1899
      %v1932 = vcvt.s32.f32 %v1900
      %v1933 = vcvt.s32.f32 %v1901
      %v1934 = vcvt.s32.f32 %v1902
      %v1935 = vcvt.s32.f32 %v1903
      %v1936 = vcvt.s32.f32 %v1904
      %v1937 = vcvt.s32.f32 %v1905
      %v1938 = vcvt.s32.f32 %v1906
      %v1939 = vcvt.s32.f32 %v1907
      %v1940 = vcvt.s32.f32 %v1908
      %v1941 = vcvt.s32.f32 %v1909
      %v1942 = vcvt.s32.f32 %v1910
      %v1943 = vcvt.s32.f32 %v1911
      %v1944 = vcvt.s32.f32 %v1912
      %v1945 = vcvt.s32.f32 %v1913
      %v1946 = vcvt.s32.f32 %v1914
      %v1947 = vcvt.s32.f32 %v1915
      %v1948 = vcvt.s32.f32 %v1916
      %v1949 = vcvt.s32.f32 %v1917
      %v1950 = vcvt.s32.f32 %v1918
      %v1951 = vcvt.s32.f32 %v1919
      %v1952 = vcvt.s32.f32 %v1920
      %v1953 = vcvt.s32.f32 %v1921
      %v1954 = vcvt.s32.f32 %v1922
      %v1955 = vsub.f32 2.0, %v1796
      %v1956 = vsub.f32 2.0, %v1798
      %v1957 = vsub.f32 2.0, %v1800
      %v1958 = vsub.f32 2.0, %v1802
      %v1959 = vsub.f32 2.0, %v1804
      %v1960 = vsub.f32 2.0, %v1806
      %v1961 = vsub.f32 2.0, %v1808
      %v1962 = vsub.f32 2.0, %v1810
      %v1963 = vsub.f32 2.0, %v1812
      %v1964 = vsub.f32 2.0, %v1814
      %v1965 = vsub.f32 2.0, %v1816
      %v1966 = vsub.f32 2.0, %v1818
      %v1967 = vsub.f32 2.0, %v1820
      %v1968 = vsub.f32 2.0, %v1822
      %v1969 = vsub.f32 2.0, %v1824
      %v1970 = vsub.f32 2.0, %v1826
      %v1971 = vsub.f32 2.0, %v1828
      %v1972 = vsub.f32 2.0, %v1830
      %v1973 = vsub.f32 2.0, %v1832
      %v1974 = vsub.f32 2.0, %v1834
      %v1975 = vsub.f32 2.0, %v1836
      %v1976 = vsub.f32 2.0, %v1838
      %v1977 = vsub.f32 2.0, %v1840
      %v1978 = vsub.f32 2.0, %v1842
      %v1979 = vsub.f32 2.0, %v1844
      %v1980 = vsub.f32 2.0, %v1846
      %v1981 = vsub.f32 2.0, %v1848
      %v1982 = vsub.f32 2.0, %v1850
      %v1983 = vsub.f32 2.0, %v1852
      %v1984 = vsub.f32 2.0, %v1854
      %v1985 = vsub.f32 2.0, %v1856
      %v1986 = vsub.f32 2.0, %v1858
      %v1987 = vmul.f32 %v1955, 6.0
      %v1988 = vmul.f32 %v1956, 6.0
      %v1989 = vmul.f32 %v1957, 6.0
      %v1990 = vmul.f32 %v1958, 6.0
      %v1991 = vmul.f32 %v1959, 6.0
      %v1992 = vmul.f32 %v1960, 6.0
      %v1993 = vmul.f32 %v1961, 6.0
      %v1994 = vmul.f32 %v1962, 6.0
      %v1995 = vmul.f32 %v1963, 6.0
      %v1996 = vmul.f32 %v1964, 6.0
      %v1997 = vmul.f32 %v1965, 6.0
      %v1998 = vmul.f32 %v1966, 6.0
      %v1999 = vmul.f32 %v1967, 6.0
      %v2000 = vmul.f32 %v1968, 6.0
      %v2001 = vmul.f32 %v1969, 6.0
      %v2002 = vmul.f32 %v1970, 6.0
      %v2003 = vmul.f32 %v1971, 6.0
      %v2004 = vmul.f32 %v1972, 6.0
      %v2005 = vmul.f32 %v1973, 6.0
      %v2006 = vmul.f32 %v1974, 6.0
      %v2007 = vmul.f32 %v1975, 6.0
      %v2008 = vmul.f32 %v1976, 6.0
      %v2009 = vmul.f32 %v1977, 6.0
      %v2010 = vmul.f32 %v1978, 6.0
      %v2011 = vmul.f32 %v1979, 6.0
      %v2012 = vmul.f32 %v1980, 6.0
      %v2013 = vmul.f32 %v1981, 6.0
      %v2014 = vmul.f32 %v1982, 6.0
      %v2015 = vmul.f32 %v1983, 6.0
      %v2016 = vmul.f32 %v1984, 6.0
      %v2017 = vmul.f32 %v1985, 6.0
      %v2018 = vmul.f32 %v1986, 6.0
      %v2019 = vrcp.pop %v1987
      %v2020 = vmul.f32 %v1923, %v2019
      %v2021 = vrcp.pop %v1988
      %v2022 = vmul.f32 %v1924, %v2021
      %v2023 = vrcp.pop %v1989
      %v2024 = vmul.f32 %v1925, %v2023
      %v2025 = vrcp.pop %v1990
      %v2026 = vmul.f32 %v1926, %v2025
      %v2027 = vrcp.pop %v1991
      %v2028 = vmul.f32 %v1927, %v2027
      %v2029 = vrcp.pop %v1992
      %v2030 = vmul.f32 %v1928, %v2029
      %v2031 = vrcp.pop %v1993
      %v2032 = vmul.f32 %v1929, %v2031
      %v2033 = vrcp.pop %v1994
      %v2034 = vmul.f32 %v1930, %v2033
      %v2035 = vrcp.pop %v1995
      %v2036 = vmul.f32 %v1931, %v2035
      %v2037 = vrcp.pop %v1996
      %v2038 = vmul.f32 %v1932, %v2037
      %v2039 = vrcp.pop %v1997
      %v2040 = vmul.f32 %v1933, %v2039
      %v2041 = vrcp.pop %v1998
      %v2042 = vmul.f32 %v1934, %v2041
      %v2043 = vrcp.pop %v1999
      %v2044 = vmul.f32 %v1935, %v2043
      %v2045 = vrcp.pop %v2000
      %v2046 = vmul.f32 %v1936, %v2045
      %v2047 = vrcp.pop %v2001
      %v2048 = vmul.f32 %v1937, %v2047
      %v2049 = vrcp.pop %v2002
      %v2050 = vmul.f32 %v1938, %v2049
      %v2051 = vrcp.pop %v2003
      %v2052 = vmul.f32 %v1939, %v2051
      %v2053 = vrcp.pop %v2004
      %v2054 = vmul.f32 %v1940, %v2053
      %v2055 = vrcp.pop %v2005
      %v2056 = vmul.f32 %v1941, %v2055
      %v2057 = vrcp.pop %v2006
      %v2058 = vmul.f32 %v1942, %v2057
      %v2059 = vrcp.pop %v2007
      %v2060 = vmul.f32 %v1943, %v2059
      %v2061 = vrcp.pop %v2008
      %v2062 = vmul.f32 %v1944, %v2061
      %v2063 = vrcp.pop %v2009
      %v2064 = vmul.f32 %v1945, %v2063
      %v2065 = vrcp.pop %v2010
      %v2066 = vmul.f32 %v1946, %v2065
      %v2067 = vrcp.pop %v2011
      %v2068 = vmul.f32 %v1947, %v2067
      %v2069 = vrcp.pop %v2012
      %v2070 = vmul.f32 %v1948, %v2069
      %v2071 = vrcp.pop %v2013
      %v2072 = vmul.f32 %v1949, %v2071
      %v2073 = vrcp.pop %v2014
      %v2074 = vmul.f32 %v1950, %v2073
      %v2075 = vrcp.pop %v2015
      %v2076 = vmul.f32 %v1951, %v2075
      %v2077 = vrcp.pop %v2016
      %v2078 = vmul.f32 %v1952, %v2077
      %v2079 = vrcp.pop %v2017
      %v2080 = vmul.f32 %v1953, %v2079
      %v2081 = vrcp.pop %v2018
      %v2082 = vmul.f32 %v1954, %v2081
      %v2083 = vmul.f32 %v2020, %v1693
      %v2084 = vmul.f32 %v2022, %v1694
      %v2085 = vmul.f32 %v2024, %v1695
      %v2086 = vmul.f32 %v2026, %v1696
      %v2087 = vmul.f32 %v2028, %v1697
      %v2088 = vmul.f32 %v2030, %v1698
      %v2089 = vmul.f32 %v2032, %v1699
      %v2090 = vmul.f32 %v2034, %v1700
      %v2091 = vmul.f32 %v2036, %v1701
      %v2092 = vmul.f32 %v2038, %v1702
      %v2093 = vmul.f32 %v2040, %v1703
      %v2094 = vmul.f32 %v2042, %v1704
      %v2095 = vmul.f32 %v2044, %v1705
      %v2096 = vmul.f32 %v2046, %v1706
      %v2097 = vmul.f32 %v2048, %v1707
      %v2098 = vmul.f32 %v2050, %v1708
      %v2099 = vmul.f32 %v2052, %v1709
      %v2100 = vmul.f32 %v2054, %v1710
      %v2101 = vmul.f32 %v2056, %v1711
      %v2102 = vmul.f32 %v2058, %v1712
      %v2103 = vmul.f32 %v2060, %v1713
      %v2104 = vmul.f32 %v2062, %v1714
      %v2105 = vmul.f32 %v2064, %v1715
      %v2106 = vmul.f32 %v2066, %v1716
      %v2107 = vmul.f32 %v2068, %v1717
      %v2108 = vmul.f32 %v2070, %v1718
      %v2109 = vmul.f32 %v2072, %v1719
      %v2110 = vmul.f32 %v2074, %v1720
      %v2111 = vmul.f32 %v2076, %v1721
      %v2112 = vmul.f32 %v2078, %v1722
      %v2113 = vmul.f32 %v2080, %v1723
      %v2114 = vmul.f32 %v2082, %v1724
      %v2115 = vadd.f32 %v2083, %v2084
      %v2116 = vadd.f32 %v2115, %v2085
      %v2117 = vadd.f32 %v2116, %v2086
      %v2118 = vadd.f32 %v2117, %v2087
      %v2119 = vadd.f32 %v2118, %v2088
      %v2120 = vadd.f32 %v2119, %v2089
      %v2121 = vadd.f32 %v2120, %v2090
      %v2122 = vadd.f32 %v2121, %v2091
      %v2123 = vadd.f32 %v2122, %v2092
      %v2124 = vadd.f32 %v2123, %v2093
      %v2125 = vadd.f32 %v2124, %v2094
      %v2126 = vadd.f32 %v2125, %v2095
      %v2127 = vadd.f32 %v2126, %v2096
      %v2128 = vadd.f32 %v2127, %v2097
      %v2129 = vadd.f32 %v2128, %v2098
      %v2130 = vadd.f32 %v2129, %v2099
      %v2131 = vadd.f32 %v2130, %v2100
      %v2132 = vadd.f32 %v2131, %v2101
      %v2133 = vadd.f32 %v2132, %v2102
      %v2134 = vadd.f32 %v2133, %v2103
      %v2135 = vadd.f32 %v2134, %v2104
      %v2136 = vadd.f32 %v2135, %v2105
      %v2137 = vadd.f32 %v2136, %v2106
      %v2138 = vadd.f32 %v2137, %v2107
      %v2139 = vadd.f32 %v2138, %v2108
      %v2140 = vadd.f32 %v2139, %v2109
      %v2141 = vadd.f32 %v2140, %v2110
      %v2142 = vadd.f32 %v2141, %v2111
      %v2143 = vadd.f32 %v2142, %v2112
      %v2144 = vadd.f32 %v2143, %v2113
      %v2145 = vadd.f32 %v2144, %v2114
      %v2146 = vrot.slane %v2145, 4
      %v2147 = vadd.f32 %v2145, %v2146
      %v2148 = vrot.slane %v2147, 2
      %v2149 = vadd.f32 %v2147, %v2148
      %v2150 = vrot.slane %v2149, 1
      %v2151 = vadd.f32 %v2149, %v2150
      %v2152 = vcvt.s32.f32 %v1725
      %v2153 = vmul.f32 %v2151, %v2152
      %2154 = vst [vmem:[#allocation4] sm:$0x1] %v2153
    $region25: #{tpu_custom_call.1} parent=1 // pred_fallthru
      _
    // Predicated region
    $region26: #{tpu_custom_call.1} parent=1 // pred_check
      _
    $region27: #{tpu_custom_call.1} parent=1 // pred_check_branch
      %2156 = sbr.rel (0) target = $region29
    $region28: #{tpu_custom_call.1} parent=1 // pred_region
      %s2158 = ssub.s32 16, 16
      %2159 = vsyncadd [#allocation5], %s2158
      %s2161 = sshll.u32 [#allocation4], 4
      %s2162 = int_to_ptr.vmem [resolvable:$true] %s2161
      %2164 = dma.vmem_to_hbm [thread:$0]  %s2162, 16, %s4, [#allocation5]
    $region29: #{tpu_custom_call.1} parent=1 // pred_fallthru
      _
    // Predicated region
    $region30: #{tpu_custom_call.1} parent=1 // pred_check
      _
    $region31: #{tpu_custom_call.1} parent=1 // pred_check_branch
      %2166 = sbr.rel (0) target = $region33
    $region32: #{tpu_custom_call.1} parent=1 // pred_region
      %2167 = dma.done [#allocation5], 16
    $region33: #{tpu_custom_call.1} parent=1 // pred_fallthru
      _
    %2168 = vsyncpa [#allocation5], 1

</llo_original>
